<compile_context>
chip_gen: v6e
topology: v6e:2x2x1
jax: 0.10.0
libtpu: 0.0.40
codegen_flags: <defaults>
</compile_context>

<pallas_src>
import jax
import jax.numpy as jnp
from jax.experimental import pallas as pl
from jax.experimental.pallas import tpu as pltpu

LANE = 128
_MAX_TILE = 1024  # max tile extent on fc1's K and N axes


def _round_up(x, m):
    return ((x + m - 1) // m) * m


def _fused_mlp_kernel(x_ref, w1_ref, b1_ref, w2_ref, b2_ref, w3_ref, b3_ref,
                      o_ref, acc1_ref, acc2_ref):
    """Fused fc1 -> fc2 -> fc3 -> abs.

    grid = (N1 tiles, K1 tiles); K1 (reduction of fc1) is the fastest axis.
    acc1: [M, tn1]  current fc1 output-column tile (f32)
    acc2: [M, 256]  fc2 output accumulator (f32), built up across N1 tiles
    """
    n = pl.program_id(0)
    k = pl.program_id(1)
    n_last = pl.num_programs(0) - 1
    k_last = pl.num_programs(1) - 1

    # Start a fresh fc1 column tile with its bias.
    @pl.when(k == 0)
    def _():
        acc1_ref[...] = jnp.broadcast_to(b1_ref[...], acc1_ref.shape)

    # fc2 accumulator initialized exactly once, with its bias.
    @pl.when((n == 0) & (k == 0))
    def _():
        acc2_ref[...] = jnp.broadcast_to(b2_ref[...], acc2_ref.shape)

    # fc1 partial product for this (n, k) weight tile.
    acc1_ref[...] += jnp.dot(x_ref[...], w1_ref[...],
                             preferred_element_type=jnp.float32)

    # This fc1 column tile is complete -> fold it into fc2 immediately.
    @pl.when(k == k_last)
    def _():
        acc2_ref[...] += jnp.dot(acc1_ref[...], w2_ref[...],
                                 preferred_element_type=jnp.float32)

    # Last grid point: fc3 + abs, single output write.
    @pl.when((n == n_last) & (k == k_last))
    def _():
        h3 = jnp.dot(acc2_ref[...], w3_ref[...],
                     preferred_element_type=jnp.float32) + b3_ref[...]
        o_ref[...] = jnp.abs(h3).astype(o_ref.dtype)


def init_arch3_params(input_size, key):
    """Deterministic init matching nn.Linear shapes (weights stored as [in, out])."""
    dims = [input_size, 2000, 256, 1]
    params = []
    for i in range(3):
        fan_in, fan_out = dims[i], dims[i + 1]
        key, kw, kb = jax.random.split(key, 3)
        bound = 1.0 / (fan_in ** 0.5)
        w = jax.random.uniform(kw, (fan_in, fan_out), jnp.float32,
                               minval=-bound, maxval=bound)
        b = jax.random.uniform(kb, (fan_out,), jnp.float32,
                               minval=-bound, maxval=bound)
        params.append((w, b))
    return params


def prepare_padded_params(params):
    """One-time zero-padding of weights/biases to tile-aligned shapes.

    Done once (outside the forward pass) so there is no per-step HBM padding
    traffic on the weights.  Zero padding does not change the math.
    """
    (w1, b1), (w2, b2), (w3, b3) = params
    k1 = w1.shape[0]
    n1 = w1.shape[1]          # 2000
    n2 = w2.shape[1]          # 256 (already lane-aligned)
    n3 = w3.shape[1]          # 1

    k1p = _round_up(k1, LANE)
    if k1p > _MAX_TILE:
        k1p = _round_up(k1p, _MAX_TILE)
    n1p = _round_up(n1, _MAX_TILE)   # 2000 -> 2048
    n3p = _round_up(n3, LANE)        # 1 -> 128 (lane-dense output)

    w1p = jnp.zeros((k1p, n1p), jnp.float32).at[:k1, :n1].set(w1)
    b1p = jnp.zeros((1, n1p), jnp.float32).at[0, :n1].set(b1)
    w2p = jnp.zeros((n1p, n2), jnp.float32).at[:n1, :].set(w2)
    b2p = b2.reshape(1, n2).astype(jnp.float32)
    w3p = jnp.zeros((n2, n3p), jnp.float32).at[:, :n3].set(w3)
    b3p = jnp.zeros((1, n3p), jnp.float32).at[0, :n3].set(b3)
    return (w1p, b1p, w2p, b2p, w3p, b3p)


@jax.jit
def arch3_forward(x, padded_params):
    w1p, b1p, w2p, b2p, w3p, b3p = padded_params

    # x.view(-1, num_flat_features) equivalent:
    x2 = x.reshape(x.shape[0], -1).astype(jnp.float32)
    m, k_in = x2.shape
    k1p, n1p = w1p.shape
    n2 = w2p.shape[1]
    n3p = w3p.shape[1]

    tk1 = k1p if k1p <= _MAX_TILE else _MAX_TILE
    tn1 = n1p if n1p <= _MAX_TILE else _MAX_TILE
    mp = _round_up(m, 8)

    # Only the tiny activation gets padded at runtime (weights are pre-padded).
    xp = jnp.zeros((mp, k1p), jnp.float32).at[:m, :k_in].set(x2)

    grid = (n1p // tn1, k1p // tk1)

    out = pl.pallas_call(
        _fused_mlp_kernel,
        out_shape=jax.ShapeDtypeStruct((mp, n3p), jnp.float32),
        grid_spec=pltpu.PrefetchScalarGridSpec(
            num_scalar_prefetch=0,
            grid=grid,
            in_specs=[
                pl.BlockSpec((mp, tk1), lambda n, k: (0, k)),    # x
                pl.BlockSpec((tk1, tn1), lambda n, k: (k, n)),   # W1 tile
                pl.BlockSpec((1, tn1), lambda n, k: (0, n)),     # b1 tile
                pl.BlockSpec((tn1, n2), lambda n, k: (n, 0)),    # W2 row tile
                pl.BlockSpec((1, n2), lambda n, k: (0, 0)),      # b2 (resident)
                pl.BlockSpec((n2, n3p), lambda n, k: (0, 0)),    # W3 (resident)
                pl.BlockSpec((1, n3p), lambda n, k: (0, 0)),     # b3 (resident)
            ],
            out_specs=pl.BlockSpec((mp, n3p), lambda n, k: (0, 0)),
            scratch_shapes=[
                pltpu.VMEM((mp, tn1), jnp.float32),   # fc1 tile accumulator
                pltpu.VMEM((mp, n2), jnp.float32),    # fc2 accumulator
            ],
        ),
        compiler_params=pltpu.CompilerParams(
            # Scratch accumulators carry state across both grid axes, so the
            # grid must run serially (no megacore split of this fused kernel).
            dimension_semantics=("arbitrary", "arbitrary"),
        ),
    )(xp, w1p, b1p, w2p, b2p, w3p, b3p)

    return out[:m, :1]


if __name__ == "__main__":
    key = jax.random.PRNGKey(0)

    batch = 8
    # Small, module-consistent input: (batch, 1, 16, 16) -> 256 flat features.
    chan, height, width = 1, 16, 16
    input_size = chan * height * width

    k_in, k_params = jax.random.split(key)
    x = jax.random.normal(k_in, (batch, chan, height, width), jnp.float32)

    params = init_arch3_params(input_size, k_params)
    padded_params = prepare_padded_params(params)

    out = arch3_forward(x, padded_params)
    out = jax.block_until_ready(out)

    # Pure-JAX reference (same math, no Pallas).
    ref = x.reshape(batch, -1)
    for w_, b_ in params:
        ref = jnp.dot(ref, w_, preferred_element_type=jnp.float32) + b_
    ref = jnp.abs(ref)

    assert out.shape == (batch, 1), out.shape
    err = float(jnp.max(jnp.abs(out - ref)))
    assert jnp.allclose(out, ref, rtol=1e-3, atol=1e-3), err

    print("KERNEL_OK")
</pallas_src>

<mosaic_0001>
module attributes {stable_mosaic.version = 11 : i64} {
  func.func @_fused_mlp_kernel(%arg0: i32, %arg1: i32, %arg2: memref<8x256xf32, #tpu.memory_space<vmem>>, %arg3: memref<256x1024xf32, #tpu.memory_space<vmem>>, %arg4: memref<1x1024xf32, #tpu.memory_space<vmem>>, %arg5: memref<1024x256xf32, #tpu.memory_space<vmem>>, %arg6: memref<1x256xf32, #tpu.memory_space<vmem>>, %arg7: memref<256x128xf32, #tpu.memory_space<vmem>>, %arg8: memref<1x128xf32, #tpu.memory_space<vmem>>, %arg9: memref<8x128xf32, #tpu.memory_space<vmem>>, %arg10: memref<8x1024xf32, #tpu.memory_space<vmem>>, %arg11: memref<8x256xf32, #tpu.memory_space<vmem>>) attributes {dimension_semantics = [#tpu.dimension_semantics<arbitrary>, #tpu.dimension_semantics<arbitrary>], iteration_bounds = array<i64: 2, 1>, scalar_prefetch = 0 : i64, scratch_operands = 2 : i64, tpu.core_type = #tpu.core_type<tc>, window_params = [{transform_indices = @transform_0, window_bounds = array<i64: 8, 256>}, {transform_indices = @transform_1, window_bounds = array<i64: 256, 1024>}, {transform_indices = @transform_2, window_bounds = array<i64: 1, 1024>}, {transform_indices = @transform_3, window_bounds = array<i64: 1024, 256>}, {pipeline_mode = #tpu.pipeline_mode<synchronous>, transform_indices = @transform_4, window_bounds = array<i64: 1, 256>}, {pipeline_mode = #tpu.pipeline_mode<synchronous>, transform_indices = @transform_5, window_bounds = array<i64: 256, 128>}, {pipeline_mode = #tpu.pipeline_mode<synchronous>, transform_indices = @transform_6, window_bounds = array<i64: 1, 128>}, {pipeline_mode = #tpu.pipeline_mode<synchronous>, transform_indices = @transform_7, window_bounds = array<i64: 8, 128>}]} {
    %c0_i32 = arith.constant 0 : i32
    %0 = arith.cmpi eq, %arg1, %c0_i32 : i32
    %1 = arith.extui %0 : i1 to i32
    %c0_i32_0 = arith.constant 0 : i32
    %2 = arith.cmpi ne, %1, %c0_i32_0 : i32
    scf.if %2 {
      %c0_15 = arith.constant 0 : index
      %c0_16 = arith.constant 0 : index
      %22 = vector.load %arg4[%c0_15, %c0_16] : memref<1x1024xf32, #tpu.memory_space<vmem>>, vector<1x1024xf32>
      %23 = vector.shape_cast %22 : vector<1x1024xf32> to vector<1x1024xf32>
      %24 = vector.broadcast %23 : vector<1x1024xf32> to vector<8x1024xf32>
      %c0_17 = arith.constant 0 : index
      %c0_18 = arith.constant 0 : index
      %25 = vector.load %arg10[%c0_17, %c0_18] : memref<8x1024xf32, #tpu.memory_space<vmem>>, vector<8x1024xf32>
      tpu.vector_store %arg10[%c0_17, %c0_18], %24 {strides = array<i32>} : memref<8x1024xf32, #tpu.memory_space<vmem>>, vector<8x1024xf32>,
    } else {
    }
    %c0_i32_1 = arith.constant 0 : i32
    %3 = arith.cmpi eq, %arg0, %c0_i32_1 : i32
    %c0_i32_2 = arith.constant 0 : i32
    %4 = arith.cmpi eq, %arg1, %c0_i32_2 : i32
    %5 = arith.andi %3, %4 : i1
    %6 = arith.extui %5 : i1 to i32
    %c0_i32_3 = arith.constant 0 : i32
    %7 = arith.cmpi ne, %6, %c0_i32_3 : i32
    scf.if %7 {
      %c0_15 = arith.constant 0 : index
      %c0_16 = arith.constant 0 : index
      %22 = vector.load %arg6[%c0_15, %c0_16] : memref<1x256xf32, #tpu.memory_space<vmem>>, vector<1x256xf32>
      %23 = vector.shape_cast %22 : vector<1x256xf32> to vector<1x256xf32>
      %24 = vector.broadcast %23 : vector<1x256xf32> to vector<8x256xf32>
      %c0_17 = arith.constant 0 : index
      %c0_18 = arith.constant 0 : index
      %25 = vector.load %arg11[%c0_17, %c0_18] : memref<8x256xf32, #tpu.memory_space<vmem>>, vector<8x256xf32>
      tpu.vector_store %arg11[%c0_17, %c0_18], %24 {strides = array<i32>} : memref<8x256xf32, #tpu.memory_space<vmem>>, vector<8x256xf32>,
    } else {
    }
    %c0 = arith.constant 0 : index
    %c0_4 = arith.constant 0 : index
    %8 = vector.load %arg10[%c0, %c0_4] : memref<8x1024xf32, #tpu.memory_space<vmem>>, vector<8x1024xf32>
    %c0_5 = arith.constant 0 : index
    %c0_6 = arith.constant 0 : index
    %9 = vector.load %arg2[%c0_5, %c0_6] : memref<8x256xf32, #tpu.memory_space<vmem>>, vector<8x256xf32>
    %c0_7 = arith.constant 0 : index
    %c0_8 = arith.constant 0 : index
    %10 = vector.load %arg3[%c0_7, %c0_8] : memref<256x1024xf32, #tpu.memory_space<vmem>>, vector<256x1024xf32>
    %cst = arith.constant dense<0.000000e+00> : vector<8x1024xf32>
    %11 = tpu.matmul %9, %10, %cst {dimension_numbers = #tpu.dot_dimension_numbers<[1], [0], [0], [1], [0, 0, 1, 1], [], []>} : vector<8x256xf32>, vector<256x1024xf32>, vector<8x1024xf32> -> vector<8x1024xf32>
    %12 = arith.addf %8, %11 : vector<8x1024xf32>
    %c0_9 = arith.constant 0 : index
    %c0_10 = arith.constant 0 : index
    %13 = vector.load %arg10[%c0_9, %c0_10] : memref<8x1024xf32, #tpu.memory_space<vmem>>, vector<8x1024xf32>
    tpu.vector_store %arg10[%c0_9, %c0_10], %12 {strides = array<i32>} : memref<8x1024xf32, #tpu.memory_space<vmem>>, vector<8x1024xf32>,
    %c0_i32_11 = arith.constant 0 : i32
    %14 = arith.cmpi eq, %arg1, %c0_i32_11 : i32
    %15 = arith.extui %14 : i1 to i32
    %c0_i32_12 = arith.constant 0 : i32
    %16 = arith.cmpi ne, %15, %c0_i32_12 : i32
    scf.if %16 {
      %c0_15 = arith.constant 0 : index
      %c0_16 = arith.constant 0 : index
      %22 = vector.load %arg11[%c0_15, %c0_16] : memref<8x256xf32, #tpu.memory_space<vmem>>, vector<8x256xf32>
      %c0_17 = arith.constant 0 : index
      %c0_18 = arith.constant 0 : index
      %23 = vector.load %arg10[%c0_17, %c0_18] : memref<8x1024xf32, #tpu.memory_space<vmem>>, vector<8x1024xf32>
      %c0_19 = arith.constant 0 : index
      %c0_20 = arith.constant 0 : index
      %24 = vector.load %arg5[%c0_19, %c0_20] : memref<1024x256xf32, #tpu.memory_space<vmem>>, vector<1024x256xf32>
      %cst_21 = arith.constant dense<0.000000e+00> : vector<8x256xf32>
      %25 = tpu.matmul %23, %24, %cst_21 {dimension_numbers = #tpu.dot_dimension_numbers<[1], [0], [0], [1], [0, 0, 1, 1], [], []>} : vector<8x1024xf32>, vector<1024x256xf32>, vector<8x256xf32> -> vector<8x256xf32>
      %26 = arith.addf %22, %25 : vector<8x256xf32>
      %c0_22 = arith.constant 0 : index
      %c0_23 = arith.constant 0 : index
      %27 = vector.load %arg11[%c0_22, %c0_23] : memref<8x256xf32, #tpu.memory_space<vmem>>, vector<8x256xf32>
      tpu.vector_store %arg11[%c0_22, %c0_23], %26 {strides = array<i32>} : memref<8x256xf32, #tpu.memory_space<vmem>>, vector<8x256xf32>,
    } else {
    }
    %c1_i32 = arith.constant 1 : i32
    %17 = arith.cmpi eq, %arg0, %c1_i32 : i32
    %c0_i32_13 = arith.constant 0 : i32
    %18 = arith.cmpi eq, %arg1, %c0_i32_13 : i32
    %19 = arith.andi %17, %18 : i1
    %20 = arith.extui %19 : i1 to i32
    %c0_i32_14 = arith.constant 0 : i32
    %21 = arith.cmpi ne, %20, %c0_i32_14 : i32
    scf.if %21 {
      %c0_15 = arith.constant 0 : index
      %c0_16 = arith.constant 0 : index
      %22 = vector.load %arg11[%c0_15, %c0_16] : memref<8x256xf32, #tpu.memory_space<vmem>>, vector<8x256xf32>
      %c0_17 = arith.constant 0 : index
      %c0_18 = arith.constant 0 : index
      %23 = vector.load %arg7[%c0_17, %c0_18] : memref<256x128xf32, #tpu.memory_space<vmem>>, vector<256x128xf32>
      %cst_19 = arith.constant dense<0.000000e+00> : vector<8x128xf32>
      %24 = tpu.matmul %22, %23, %cst_19 {dimension_numbers = #tpu.dot_dimension_numbers<[1], [0], [0], [1], [0, 0, 1, 1], [], []>} : vector<8x256xf32>, vector<256x128xf32>, vector<8x128xf32> -> vector<8x128xf32>
      %c0_20 = arith.constant 0 : index
      %c0_21 = arith.constant 0 : index
      %25 = vector.load %arg8[%c0_20, %c0_21] : memref<1x128xf32, #tpu.memory_space<vmem>>, vector<1x128xf32>
      %26 = vector.broadcast %25 : vector<1x128xf32> to vector<8x128xf32>
      %27 = arith.addf %24, %26 : vector<8x128xf32>
      %28 = math.absf %27 : vector<8x128xf32>
      %c0_22 = arith.constant 0 : index
      %c0_23 = arith.constant 0 : index
      %29 = vector.load %arg9[%c0_22, %c0_23] : memref<8x128xf32, #tpu.memory_space<vmem>>, vector<8x128xf32>
      tpu.vector_store %arg9[%c0_22, %c0_23], %28 {strides = array<i32>} : memref<8x128xf32, #tpu.memory_space<vmem>>, vector<8x128xf32>,
    } else {
    }
    return
  }
  func.func @transform_0(%arg0: i32, %arg1: i32) -> (i32, i32) {
    %c0_i32 = arith.constant 0 : i32
    %c0_i32_0 = arith.constant 0 : i32
    return %c0_i32, %arg1 : i32, i32
  }
  func.func @transform_1(%arg0: i32, %arg1: i32) -> (i32, i32) {
    %c0_i32 = arith.constant 0 : i32
    return %arg1, %arg0 : i32, i32
  }
  func.func @transform_2(%arg0: i32, %arg1: i32) -> (i32, i32) {
    %c0_i32 = arith.constant 0 : i32
    %c0_i32_0 = arith.constant 0 : i32
    return %c0_i32, %arg0 : i32, i32
  }
  func.func @transform_3(%arg0: i32, %arg1: i32) -> (i32, i32) {
    %c0_i32 = arith.constant 0 : i32
    %c0_i32_0 = arith.constant 0 : i32
    return %arg0, %c0_i32 : i32, i32
  }
  func.func @transform_4(%arg0: i32, %arg1: i32) -> (i32, i32) {
    %c0_i32 = arith.constant 0 : i32
    %c0_i32_0 = arith.constant 0 : i32
    %c0_i32_1 = arith.constant 0 : i32
    return %c0_i32, %c0_i32_0 : i32, i32
  }
  func.func @transform_5(%arg0: i32, %arg1: i32) -> (i32, i32) {
    %c0_i32 = arith.constant 0 : i32
    %c0_i32_0 = arith.constant 0 : i32
    %c0_i32_1 = arith.constant 0 : i32
    return %c0_i32, %c0_i32_0 : i32, i32
  }
  func.func @transform_6(%arg0: i32, %arg1: i32) -> (i32, i32) {
    %c0_i32 = arith.constant 0 : i32
    %c0_i32_0 = arith.constant 0 : i32
    %c0_i32_1 = arith.constant 0 : i32
    return %c0_i32, %c0_i32_0 : i32, i32
  }
  func.func @transform_7(%arg0: i32, %arg1: i32) -> (i32, i32) {
    %c0_i32 = arith.constant 0 : i32
    %c0_i32_0 = arith.constant 0 : i32
    %c0_i32_1 = arith.constant 0 : i32
    return %c0_i32, %c0_i32_0 : i32, i32
  }
}

</mosaic_0001>

<llo_original>
// kernel: arch3_forward.1
$region0: #{arch3_forward.1}
  #allocation0 [shape = 'u32[]', space=smem, size = 0x4, offset = 0x4, fixed_abs, tag = 'smem constant byte address 0x4 - core index']
  #allocation1 [shape = 'u32[144,128]{1,0:T(1,128)}', space=vmem, size = 0x12000, scoped, tag = 'internal scratch']
  #allocation2 [shape = 'f32[8,1024]{1,0:T(8,128)}', space=vmem, size = 0x8000, scoped, tag = 'scratch operand']
  #allocation3 [shape = 'f32[8,256]{1,0:T(8,128)}', space=vmem, size = 0x2000, scoped, tag = 'scratch operand']
  %s0 = inlined_call_operand.vmem [shape: f32[8,256], index: 0, kind: input, shape index: {}]
  %s1 = inlined_call_operand.hbm [shape: f32[256,2048], index: 1, kind: input, shape index: {}]
  %s2 = inlined_call_operand.hbm [shape: f32[1,2048], index: 2, kind: input, shape index: {}]
  %s3 = inlined_call_operand.hbm [shape: f32[2048,256], index: 3, kind: input, shape index: {}]
  %s4 = inlined_call_operand.hbm [shape: f32[1,256], index: 4, kind: input, shape index: {}]
  %s5 = inlined_call_operand.hbm [shape: f32[256,128], index: 5, kind: input, shape index: {}]
  %s6 = inlined_call_operand.hbm [shape: f32[1,128], index: 6, kind: input, shape index: {}]
  %s7 = inlined_call_operand.vmem [shape: f32[8,128], index: 7, kind: output, shape index: {}]
  %s8 = sld [smem:[#allocation0]]
  $region101: #{arch3_forward.1} parent=0
    _
  %s10 = ssub.s32 1, %s8
  %s11 = scalar_select 0, %s10, %s8
  $region1: #{arch3_forward.1} parent=0
    #allocation4 [shape = 'u8[2097152]{0}', space=vmem, size = 0x200000, scoped, tag = 'input window, operand 1']
    #allocation5 [shape = 's32[2]{0}', space=sflag, size = 0x8, scoped, tag = 'scoped memory for arch3_forward.1']
    #allocation6 [shape = 'u8[8192]{0}', space=vmem, size = 0x2000, scoped, tag = 'input window, operand 2']
    #allocation7 [shape = 's32[2]{0}', space=sflag, size = 0x8, scoped, tag = 'scoped memory for arch3_forward.1']
    #allocation8 [shape = 'u8[2097152]{0}', space=vmem, size = 0x200000, scoped, tag = 'input window, operand 3']
    #allocation9 [shape = 'u8[1024]{0}', space=vmem, size = 0x400, scoped, tag = 'input window, operand 4, single buffered']
    #allocation10 [shape = 's32[1]{0}', space=sflag, size = 0x4, scoped, tag = 'scoped memory for arch3_forward.1']
    #allocation11 [shape = 'u8[131072]{0}', space=vmem, size = 0x20000, scoped, tag = 'input window, operand 5, single buffered']
    #allocation12 [shape = 'u8[512]{0}', space=vmem, size = 0x400, scoped, tag = 'input window, operand 6, single buffered']
    #allocation13 [shape = 's32[1]{0}', space=sflag, size = 0x4, scoped, tag = 'scoped memory for arch3_forward.1']
    %12 = vsyncpa [#allocation5], 0
    %s13 = scalar_lea.sflag [#allocation5], 1
    %14 = vsyncpa %s13, 0
    %15 = vsyncpa [#allocation7], 0
    %s16 = scalar_lea.sflag [#allocation7], 1
    %17 = vsyncpa %s16, 0
    %18 = vsyncpa [#allocation10], 0
    %19 = vsyncpa [#allocation13], 0
    loop: start=0, step=1, limit=4
    $region2: #{arch3_forward.1} parent=1 // loop_pre_header
      _
    $region3: #{arch3_forward.1} parent=1 // loop_header
      %s21 = sphi 0, %s25
      %p22 = scmp.ge.s32.totalorder %s21, 4
      %s28 = sphi 0, %s40
      %s29 = sphi 0, %s36
      %s30 = sphi 0, %s28
      %s31 = sphi 0, %s29
      %s32 = sphi 0, %s30
      %s33 = sphi 0, %s31
      %s43 = sphi 0, %s45
      %s46 = sphi 0, %s43
      %s47 = sphi 0, %s46
      %s63 = sphi 0, %s47
      %s71 = sphi 0, %s73
      %s74 = sphi 0, %s71
      %s75 = sphi 0, %s74
      %s91 = sphi 0, %s75
      %s97 = sphi 0, %s99
      %s100 = sphi 0, %s97
      %s101 = sphi 0, %s100
      %s117 = sphi 0, %s101
      %s123 = sphi 0, %s125
      %s126 = sphi 0, %s123
      %s127 = sphi 0, %s126
      %s143 = sphi 0, %s127
      %s147 = sphi 0, %s147
      %s149 = sphi 0, %s147
      %s150 = sphi 0, %s149
      %s164 = sphi 0, %s150
      %s168 = sphi 0, %s168
      %s170 = sphi 0, %s168
      %s171 = sphi 0, %s170
      %s185 = sphi 0, %s171
      %s189 = sphi 0, %s189
      %s191 = sphi 0, %s189
      %s192 = sphi 0, %s191
      %s206 = sphi 0, %s192
      %s210 = sphi 0, %s210
      %s212 = sphi 0, %s210
      %s213 = sphi 0, %s212
      %s227 = sphi 0, %s213
    $region4: #{arch3_forward.1} parent=1 // loop_header_branch
      %24 = sbr.rel (%p22) target = $region8
    $region5: #{arch3_forward.1} parent=1 // loop_body
      %s26 = ssub.s32 %s21, 1
      %s27 = ssub.s32 %s21, 2
      %s34 = sadd.s32 1, %s29
      %p35 = scmp.ge.s32.totalorder %s34, 1
      %s36 = scalar_select %p35, 0, %s34
      %s37 = sadd.s32 1, %s28
      %s38 = scalar_select %p35, %s37, %s28
      %p39 = scmp.ge.s32.totalorder %s38, 2
      %s40 = scalar_select %p39, 0, %s38
      %s41 = ssub.s32 %s29, %s36
      %p42 = scmp.eq.s32.totalorder %s41, 0
      %s44 = sadd.s32 %s43, 1
      %s45 = scalar_select %p42, %s43, %s44
      %p48 = pneg %p42
      %p49 = scmp.eq.s32.totalorder %s21, 1
      %p50 = por %p48, %p49
      %p51 = scmp.ne.s32.totalorder %s43, %s46
      %p52 = scmp.eq.s32.totalorder %s21, 0
      %p53 = por %p51, %p52
      %p54 = scmp.ne.s32.totalorder %s43, %s46
      %p55 = scmp.eq.s32.totalorder %s26, 1
      %p56 = por %p54, %p55
      %p57 = scmp.ne.s32.totalorder %s46, %s47
      %p58 = scmp.eq.s32.totalorder %s26, 0
      %p59 = por %p57, %p58
      %p60 = scmp.ne.s32.totalorder %s46, %s47
      %p61 = scmp.eq.s32.totalorder %s27, 1
      %p62 = por %p60, %p61
      %p64 = scmp.ne.s32.totalorder %s47, %s63
      %p65 = scmp.eq.s32.totalorder %s27, 0
      %p66 = por %p64, %p65
      %s67 = ssub.s32 %s29, %s36
      %s68 = ssub.s32 %s28, %s40
      %s69 = sor.u32 %s67, %s68
      %p70 = scmp.eq.s32.totalorder %s69, 0
      %s72 = sadd.s32 %s71, 1
      %s73 = scalar_select %p70, %s71, %s72
      %p76 = pneg %p70
      %p77 = scmp.eq.s32.totalorder %s21, 1
      %p78 = por %p76, %p77
      %p79 = scmp.ne.s32.totalorder %s71, %s74
      %p80 = scmp.eq.s32.totalorder %s21, 0
      %p81 = por %p79, %p80
      %p82 = scmp.ne.s32.totalorder %s71, %s74
      %p83 = scmp.eq.s32.totalorder %s26, 1
      %p84 = por %p82, %p83
      %p85 = scmp.ne.s32.totalorder %s74, %s75
      %p86 = scmp.eq.s32.totalorder %s26, 0
      %p87 = por %p85, %p86
      %p88 = scmp.ne.s32.totalorder %s74, %s75
      %p89 = scmp.eq.s32.totalorder %s27, 1
      %p90 = por %p88, %p89
      %p92 = scmp.ne.s32.totalorder %s75, %s91
      %p93 = scmp.eq.s32.totalorder %s27, 0
      %p94 = por %p92, %p93
      %s95 = ssub.s32 %s28, %s40
      %p96 = scmp.eq.s32.totalorder %s95, 0
      %s98 = sadd.s32 %s97, 1
      %s99 = scalar_select %p96, %s97, %s98
      %p102 = pneg %p96
      %p103 = scmp.eq.s32.totalorder %s21, 1
      %p104 = por %p102, %p103
      %p105 = scmp.ne.s32.totalorder %s97, %s100
      %p106 = scmp.eq.s32.totalorder %s21, 0
      %p107 = por %p105, %p106
      %p108 = scmp.ne.s32.totalorder %s97, %s100
      %p109 = scmp.eq.s32.totalorder %s26, 1
      %p110 = por %p108, %p109
      %p111 = scmp.ne.s32.totalorder %s100, %s101
      %p112 = scmp.eq.s32.totalorder %s26, 0
      %p113 = por %p111, %p112
      %p114 = scmp.ne.s32.totalorder %s100, %s101
      %p115 = scmp.eq.s32.totalorder %s27, 1
      %p116 = por %p114, %p115
      %p118 = scmp.ne.s32.totalorder %s101, %s117
      %p119 = scmp.eq.s32.totalorder %s27, 0
      %p120 = por %p118, %p119
      %s121 = ssub.s32 %s28, %s40
      %p122 = scmp.eq.s32.totalorder %s121, 0
      %s124 = sadd.s32 %s123, 1
      %s125 = scalar_select %p122, %s123, %s124
      %p128 = pneg %p122
      %p129 = scmp.eq.s32.totalorder %s21, 1
      %p130 = por %p128, %p129
      %p131 = scmp.ne.s32.totalorder %s123, %s126
      %p132 = scmp.eq.s32.totalorder %s21, 0
      %p133 = por %p131, %p132
      %p134 = scmp.ne.s32.totalorder %s123, %s126
      %p135 = scmp.eq.s32.totalorder %s26, 1
      %p136 = por %p134, %p135
      %p137 = scmp.ne.s32.totalorder %s126, %s127
      %p138 = scmp.eq.s32.totalorder %s26, 0
      %p139 = por %p137, %p138
      %p140 = scmp.ne.s32.totalorder %s126, %s127
      %p141 = scmp.eq.s32.totalorder %s27, 1
      %p142 = por %p140, %p141
      %p144 = scmp.ne.s32.totalorder %s127, %s143
      %p145 = scmp.eq.s32.totalorder %s27, 0
      %p146 = por %p144, %p145
      %s148 = sadd.s32 %s147, 1
      %p151 = scmp.eq.s32.totalorder %s21, 1
      %p152 = scmp.ne.s32.totalorder %s147, %s149
      %p153 = scmp.eq.s32.totalorder %s21, 0
      %p154 = por %p152, %p153
      %p155 = scmp.ne.s32.totalorder %s147, %s149
      %p156 = scmp.eq.s32.totalorder %s26, 1
      %p157 = por %p155, %p156
      %p158 = scmp.ne.s32.totalorder %s149, %s150
      %p159 = scmp.eq.s32.totalorder %s26, 0
      %p160 = por %p158, %p159
      %p161 = scmp.ne.s32.totalorder %s149, %s150
      %p162 = scmp.eq.s32.totalorder %s27, 1
      %p163 = por %p161, %p162
      %p165 = scmp.ne.s32.totalorder %s150, %s164
      %p166 = scmp.eq.s32.totalorder %s27, 0
      %p167 = por %p165, %p166
      %s169 = sadd.s32 %s168, 1
      %p172 = scmp.eq.s32.totalorder %s21, 1
      %p173 = scmp.ne.s32.totalorder %s168, %s170
      %p174 = scmp.eq.s32.totalorder %s21, 0
      %p175 = por %p173, %p174
      %p176 = scmp.ne.s32.totalorder %s168, %s170
      %p177 = scmp.eq.s32.totalorder %s26, 1
      %p178 = por %p176, %p177
      %p179 = scmp.ne.s32.totalorder %s170, %s171
      %p180 = scmp.eq.s32.totalorder %s26, 0
      %p181 = por %p179, %p180
      %p182 = scmp.ne.s32.totalorder %s170, %s171
      %p183 = scmp.eq.s32.totalorder %s27, 1
      %p184 = por %p182, %p183
      %p186 = scmp.ne.s32.totalorder %s171, %s185
      %p187 = scmp.eq.s32.totalorder %s27, 0
      %p188 = por %p186, %p187
      %s190 = sadd.s32 %s189, 1
      %p193 = scmp.eq.s32.totalorder %s21, 1
      %p194 = scmp.ne.s32.totalorder %s189, %s191
      %p195 = scmp.eq.s32.totalorder %s21, 0
      %p196 = por %p194, %p195
      %p197 = scmp.ne.s32.totalorder %s189, %s191
      %p198 = scmp.eq.s32.totalorder %s26, 1
      %p199 = por %p197, %p198
      %p200 = scmp.ne.s32.totalorder %s191, %s192
      %p201 = scmp.eq.s32.totalorder %s26, 0
      %p202 = por %p200, %p201
      %p203 = scmp.ne.s32.totalorder %s191, %s192
      %p204 = scmp.eq.s32.totalorder %s27, 1
      %p205 = por %p203, %p204
      %p207 = scmp.ne.s32.totalorder %s192, %s206
      %p208 = scmp.eq.s32.totalorder %s27, 0
      %p209 = por %p207, %p208
      %s211 = sadd.s32 %s210, 1
      %p214 = scmp.eq.s32.totalorder %s21, 1
      %p215 = scmp.ne.s32.totalorder %s210, %s212
      %p216 = scmp.eq.s32.totalorder %s21, 0
      %p217 = por %p215, %p216
      %p218 = scmp.ne.s32.totalorder %s210, %s212
      %p219 = scmp.eq.s32.totalorder %s26, 1
      %p220 = por %p218, %p219
      %p221 = scmp.ne.s32.totalorder %s212, %s213
      %p222 = scmp.eq.s32.totalorder %s26, 0
      %p223 = por %p221, %p222
      %p224 = scmp.ne.s32.totalorder %s212, %s213
      %p225 = scmp.eq.s32.totalorder %s27, 1
      %p226 = por %p224, %p225
      %p228 = scmp.ne.s32.totalorder %s213, %s227
      %p229 = scmp.eq.s32.totalorder %s27, 0
      %p230 = por %p228, %p229
      %p231 = scmp.le.s32.totalorder 1, %s21
      %p232 = scmp.lt.s32.totalorder %s21, 3
      %p233 = pnand %p231, %p232
      %p234 = pneg %p233
      // Predicated region
      $region9: #{arch3_forward.1} parent=5 // pred_check
        _
      $region10: #{arch3_forward.1} parent=5 // pred_check_branch
        %236 = sbr.rel (%p233) target = $region12
      $region11: #{arch3_forward.1} parent=5 // pred_region
        %s237 = ssub.s32 %s21, 1
        // Predicated region
        $region13: #{arch3_forward.1} parent=11 // pred_check
          %p238 = pneg %p59
        $region14: #{arch3_forward.1} parent=11 // pred_check_branch
          %240 = sbr.rel (%p238) target = $region16
        $region15: #{arch3_forward.1} parent=11 // pred_region
          %s241 = smul.u32 2, %s31
          %p242 = scmp.lt.s32.totalorder %s241, 1
          %s243 = scalar_select %p242, %s241, 1
          %s244 = smul.addr %s243, 8
          %s245 = scalar_lea.vmem %s0, %s244
          %s246 = smul.u32 2, %s31
        $region16: #{arch3_forward.1} parent=11 // pred_fallthru
          _
        // Predicated region
        $region17: #{arch3_forward.1} parent=11 // pred_check
          %p247 = pneg %p160
        $region18: #{arch3_forward.1} parent=11 // pred_check_branch
          %249 = sbr.rel (%p247) target = $region20
        $region19: #{arch3_forward.1} parent=11 // pred_region
          %s251 = ssub.s32 32, 32
          %252 = vsyncadd [#allocation10], %s251
          %s254 = sshll.u32 [#allocation9], 4
          %s255 = int_to_ptr.vmem [resolvable:$true] %s254
          %257 = dma.hbm_to_vmem [thread:$0]  %s4, 32, %s255, [#allocation10]
        $region20: #{arch3_forward.1} parent=11 // pred_fallthru
          _
        // Predicated region
        $region21: #{arch3_forward.1} parent=11 // pred_check
          %p258 = pneg %p181
        $region22: #{arch3_forward.1} parent=11 // pred_check_branch
          %260 = sbr.rel (%p258) target = $region24
        $region23: #{arch3_forward.1} parent=11 // pred_region
          %s262 = ssub.s32 4096, 4096
          %263 = vsyncadd [#allocation10], %s262
          %s264 = sshll.u32 [#allocation11], 4
          %s265 = int_to_ptr.vmem [resolvable:$true] %s264
          %270 = dma.hbm_to_vmem [thread:$0]  %s5, 4096, %s265, [#allocation10], 128, 128, 8
        $region24: #{arch3_forward.1} parent=11 // pred_fallthru
          _
        // Predicated region
        $region25: #{arch3_forward.1} parent=11 // pred_check
          %p271 = pneg %p202
        $region26: #{arch3_forward.1} parent=11 // pred_check_branch
          %273 = sbr.rel (%p271) target = $region28
        $region27: #{arch3_forward.1} parent=11 // pred_region
          %s275 = ssub.s32 16, 16
          %276 = vsyncadd [#allocation13], %s275
          %s278 = sshll.u32 [#allocation12], 4
          %s279 = int_to_ptr.vmem [resolvable:$true] %s278
          %281 = dma.hbm_to_vmem [thread:$0]  %s6, 16, %s279, [#allocation13]
        $region28: #{arch3_forward.1} parent=11 // pred_fallthru
          _
      $region12: #{arch3_forward.1} parent=5 // pred_fallthru
        _
      %p282 = scmp.lt.s32.totalorder %s21, 2
      // Predicated region
      $region29: #{arch3_forward.1} parent=5 // pred_check
        %p283 = pneg %p282
      $region30: #{arch3_forward.1} parent=5 // pred_check_branch
        %285 = sbr.rel (%p283) target = $region32
      $region31: #{arch3_forward.1} parent=5 // pred_region
        // Predicated region
        $region33: #{arch3_forward.1} parent=31 // pred_check
          %p286 = pneg %p81
        $region34: #{arch3_forward.1} parent=31 // pred_check_branch
          %288 = sbr.rel (%p286) target = $region36
        $region35: #{arch3_forward.1} parent=31 // pred_region
          %s289 = sand.u32 %s71, 1
          %s290 = scalar_lea.sflag [#allocation5], %s289
          %s291 = sand.u32 %s71, 1
          %s292 = smul.addr %s291, 2048
          %s293 = scalar_lea.vmem [#allocation4], %s292
          %s294 = smul.u32 32, %s29
          %s295 = smul.u32 8, %s28
          %s297 = ssub.s32 32768, 32768
          %298 = vsyncadd %s290, %s297
          %s299 = smul.addr %s294, 16
          %s300 = sadd.s32 %s295, %s299
          %s301 = smul.addr %s300, 128
          %s302 = scalar_lea.hbm %s1, %s301
          %s303 = sshll.u32 %s293, 4
          %s304 = int_to_ptr.vmem [resolvable:$true] %s303
          %309 = dma.hbm_to_vmem [thread:$0]  %s302, 32768, %s304, %s290, 2048, 1024, 64
        $region36: #{arch3_forward.1} parent=31 // pred_fallthru
          _
        // Predicated region
        $region37: #{arch3_forward.1} parent=31 // pred_check
          %p310 = pneg %p107
        $region38: #{arch3_forward.1} parent=31 // pred_check_branch
          %312 = sbr.rel (%p310) target = $region40
        $region39: #{arch3_forward.1} parent=31 // pred_region
          %s313 = sand.u32 %s21, 1
          %s314 = scalar_lea.sflag [#allocation7], %s313
          %s315 = sand.u32 %s97, 1
          %s316 = smul.addr %s315, 8
          %s317 = scalar_lea.vmem [#allocation6], %s316
          %s318 = smul.u32 8, %s28
          %s320 = ssub.s32 128, 128
          %321 = vsyncadd %s314, %s320
          %s322 = smul.addr %s318, 16
          %s323 = scalar_lea.hbm %s2, %s322
          %s325 = sshll.u32 %s317, 4
          %s326 = int_to_ptr.vmem [resolvable:$true] %s325
          %328 = dma.hbm_to_vmem [thread:$0]  %s323, 128, %s326, %s314
        $region40: #{arch3_forward.1} parent=31 // pred_fallthru
          _
        // Predicated region
        $region41: #{arch3_forward.1} parent=31 // pred_check
          %p329 = pneg %p133
        $region42: #{arch3_forward.1} parent=31 // pred_check_branch
          %331 = sbr.rel (%p329) target = $region44
        $region43: #{arch3_forward.1} parent=31 // pred_region
          %s332 = sand.u32 %s21, 1
          %s333 = scalar_lea.sflag [#allocation7], %s332
          %s334 = sand.u32 %s123, 1
          %s335 = smul.addr %s334, 2048
          %s336 = scalar_lea.vmem [#allocation8], %s335
          %s337 = smul.u32 128, %s28
          %s339 = ssub.s32 32768, 32768
          %340 = vsyncadd %s333, %s339
          %s341 = smul.addr %s337, 2
          %s342 = smul.addr %s341, 128
          %s343 = scalar_lea.hbm %s3, %s342
          %s344 = sshll.u32 %s336, 4
          %s345 = int_to_ptr.vmem [resolvable:$true] %s344
          %350 = dma.hbm_to_vmem [thread:$0]  %s343, 32768, %s345, %s333, 256, 256, 16
        $region44: #{arch3_forward.1} parent=31 // pred_fallthru
          _
      $region32: #{arch3_forward.1} parent=5 // pred_fallthru
        _
      %p351 = scmp.le.s32.totalorder 1, %s21
      %p352 = scmp.lt.s32.totalorder %s21, 3
      %p353 = pnand %p351, %p352
      %p354 = pneg %p353
      // Predicated region
      $region45: #{arch3_forward.1} parent=5 // pred_check
        _
      $region46: #{arch3_forward.1} parent=5 // pred_check_branch
        %356 = sbr.rel (%p353) target = $region48
      $region47: #{arch3_forward.1} parent=5 // pred_region
        %s357 = ssub.s32 %s21, 1
        %s358 = sand.u32 %s74, 1
        %s359 = scalar_lea.sflag [#allocation5], %s358
        %s360 = sand.u32 %s74, 1
        %s361 = smul.addr %s360, 2048
        %s362 = scalar_lea.vmem [#allocation4], %s361
        // Predicated region
        $region49: #{arch3_forward.1} parent=47 // pred_check
          %p363 = pneg %p87
        $region50: #{arch3_forward.1} parent=47 // pred_check_branch
          %365 = sbr.rel (%p363) target = $region52
        $region51: #{arch3_forward.1} parent=47 // pred_region
          %366 = dma.done %s359, 32768
        $region52: #{arch3_forward.1} parent=47 // pred_fallthru
          _
        %s367 = sand.u32 %s26, 1
        %s368 = scalar_lea.sflag [#allocation7], %s367
        %s369 = sand.u32 %s100, 1
        %s370 = smul.addr %s369, 8
        %s371 = scalar_lea.vmem [#allocation6], %s370
        // Predicated region
        $region53: #{arch3_forward.1} parent=47 // pred_check
          %p372 = pneg %p113
        $region54: #{arch3_forward.1} parent=47 // pred_check_branch
          %374 = sbr.rel (%p372) target = $region56
        $region55: #{arch3_forward.1} parent=47 // pred_region
          %375 = dma.done %s368, 128
        $region56: #{arch3_forward.1} parent=47 // pred_fallthru
          _
        %s376 = sand.u32 %s26, 1
        %s377 = scalar_lea.sflag [#allocation7], %s376
        %s378 = sand.u32 %s126, 1
        %s379 = smul.addr %s378, 2048
        %s380 = scalar_lea.vmem [#allocation8], %s379
        // Predicated region
        $region57: #{arch3_forward.1} parent=47 // pred_check
          %p381 = pneg %p139
        $region58: #{arch3_forward.1} parent=47 // pred_check_branch
          %383 = sbr.rel (%p381) target = $region60
        $region59: #{arch3_forward.1} parent=47 // pred_region
          %384 = dma.done %s377, 32768
        $region60: #{arch3_forward.1} parent=47 // pred_fallthru
          _
        // Predicated region
        $region61: #{arch3_forward.1} parent=47 // pred_check
          %p385 = pneg %p160
        $region62: #{arch3_forward.1} parent=47 // pred_check_branch
          %387 = sbr.rel (%p385) target = $region64
        $region63: #{arch3_forward.1} parent=47 // pred_region
          %388 = dma.done [#allocation10], 32
        $region64: #{arch3_forward.1} parent=47 // pred_fallthru
          _
        // Predicated region
        $region65: #{arch3_forward.1} parent=47 // pred_check
          %p389 = pneg %p181
        $region66: #{arch3_forward.1} parent=47 // pred_check_branch
          %391 = sbr.rel (%p389) target = $region68
        $region67: #{arch3_forward.1} parent=47 // pred_region
          %392 = dma.done [#allocation10], 4096
        $region68: #{arch3_forward.1} parent=47 // pred_fallthru
          _
        // Predicated region
        $region69: #{arch3_forward.1} parent=47 // pred_check
          %p393 = pneg %p202
        $region70: #{arch3_forward.1} parent=47 // pred_check_branch
          %395 = sbr.rel (%p393) target = $region72
        $region71: #{arch3_forward.1} parent=47 // pred_region
          %396 = dma.done [#allocation13], 16
        $region72: #{arch3_forward.1} parent=47 // pred_fallthru
          _
        %s397 = smul.u32 2, %s31
        %p398 = scmp.lt.s32.totalorder %s397, 1
        %s399 = scalar_select %p398, %s397, 1
        %s400 = smul.addr %s399, 8
        %s401 = scalar_lea.vmem %s0, %s400
        %p402 = pneg %p59
        %p403 = pneg %p56
        %s404 = sand.u32 %s74, 1
        %s405 = scalar_lea.sflag [#allocation5], %s404
        %s406 = sand.u32 %s74, 1
        %s407 = smul.addr %s406, 2048
        %s408 = scalar_lea.vmem [#allocation4], %s407
        %p409 = pneg %p87
        %p410 = pneg %p84
        %s411 = sand.u32 %s26, 1
        %s412 = scalar_lea.sflag [#allocation7], %s411
        %s413 = sand.u32 %s100, 1
        %s414 = smul.addr %s413, 8
        %s415 = scalar_lea.vmem [#allocation6], %s414
        %p416 = pneg %p113
        %p417 = pneg %p110
        %s418 = sand.u32 %s26, 1
        %s419 = scalar_lea.sflag [#allocation7], %s418
        %s420 = sand.u32 %s126, 1
        %s421 = smul.addr %s420, 2048
        %s422 = scalar_lea.vmem [#allocation8], %s421
        %p423 = pneg %p139
        %p424 = pneg %p136
        %p425 = pneg %p160
        %p426 = pneg %p157
        %p427 = pneg %p181
        %p428 = pneg %p178
        %p429 = pneg %p202
        %p430 = pneg %p199
        %p431 = pneg %p223
        %p432 = pneg %p220
        %s433 = smul.u32 2, %s31
        %p434 = scmp.lt.s32.totalorder %s433, 1
        %s435 = scalar_select %p434, %s433, 1
        %s436 = smul.addr %s435, 8
        %s437 = scalar_lea.vmem %s0, %s436
        %s438 = smul.u32 2, %s31
        %s439 = smul.u32 32, %s31
        %s440 = smul.u32 8, %s30
        %s441 = smul.u32 8, %s30
        %s442 = smul.u32 128, %s30
        %p443 = scmp.eq.s32.totalorder %s31, 0
        // Predicated region
        $region73: #{arch3_forward.1} parent=47 // pred_check
          %p444 = pneg %p443
        $region74: #{arch3_forward.1} parent=47 // pred_check_branch
          %446 = sbr.rel (%p444) target = $region76
        $region75: #{arch3_forward.1} parent=47 // pred_region
          %v447 = vld [vmem:[%s371] sm:$0xff]
          %v449 = vlaneseq
          %v450 = vshrl.u32 %v449, 7
          %v451 = vsub.s32 0, %v450
          %v452 = vrot.slane %v447, %v451
          %v453 = vlaneseq
          %v454 = vshrl.u32 %v453, 7
          %v455 = vsub.s32 1, %v454
          %v456 = vrot.slane %v447, %v455
          %v457 = vlaneseq
          %v458 = vshrl.u32 %v457, 7
          %v459 = vsub.s32 2, %v458
          %v460 = vrot.slane %v447, %v459
          %v461 = vlaneseq
          %v462 = vshrl.u32 %v461, 7
          %v463 = vsub.s32 3, %v462
          %v464 = vrot.slane %v447, %v463
          %v465 = vlaneseq
          %v466 = vshrl.u32 %v465, 7
          %v467 = vsub.s32 4, %v466
          %v468 = vrot.slane %v447, %v467
          %v469 = vlaneseq
          %v470 = vshrl.u32 %v469, 7
          %v471 = vsub.s32 5, %v470
          %v472 = vrot.slane %v447, %v471
          %v473 = vlaneseq
          %v474 = vshrl.u32 %v473, 7
          %v475 = vsub.s32 6, %v474
          %v476 = vrot.slane %v447, %v475
          %v477 = vlaneseq
          %v478 = vshrl.u32 %v477, 7
          %v479 = vsub.s32 7, %v478
          %v480 = vrot.slane %v447, %v479
          %489 = vst [vmem:[#allocation2] sm:$0xff] %v452
          %490 = vst [vmem:[#allocation2 + $0x8] sm:$0xff] %v456
          %491 = vst [vmem:[#allocation2 + $0x10] sm:$0xff] %v460
          %492 = vst [vmem:[#allocation2 + $0x18] sm:$0xff] %v464
          %493 = vst [vmem:[#allocation2 + $0x20] sm:$0xff] %v468
          %494 = vst [vmem:[#allocation2 + $0x28] sm:$0xff] %v472
          %495 = vst [vmem:[#allocation2 + $0x30] sm:$0xff] %v476
          %496 = vst [vmem:[#allocation2 + $0x38] sm:$0xff] %v480
        $region76: #{arch3_forward.1} parent=47 // pred_fallthru
          _
        %p497 = scmp.eq.s32.totalorder %s30, 0
        %p498 = pnand %p497, %p443
        %p499 = pneg %p498
        // Predicated region
        $region77: #{arch3_forward.1} parent=47 // pred_check
          _
        $region78: #{arch3_forward.1} parent=47 // pred_check_branch
          %501 = sbr.rel (%p498) target = $region80
        $region79: #{arch3_forward.1} parent=47 // pred_region
          %v502 = vld [vmem:[#allocation9] sm:$0x3]
          %v504 = vlaneseq
          %v505 = vshrl.u32 %v504, 7
          %v506 = vsub.s32 0, %v505
          %v507 = vrot.slane %v502, %v506
          %v508 = vlaneseq
          %v509 = vshrl.u32 %v508, 7
          %v510 = vsub.s32 1, %v509
          %v511 = vrot.slane %v502, %v510
          %514 = vst [vmem:[#allocation3] sm:$0xff] %v507
          %515 = vst [vmem:[#allocation3 + $0x8] sm:$0xff] %v511
        $region80: #{arch3_forward.1} parent=47 // pred_fallthru
          _
        %v516 = vld [vmem:[#allocation2] sm:$0xff]
        %v517 = vld [vmem:[#allocation2 + $0x8] sm:$0xff]
        %v518 = vld [vmem:[#allocation2 + $0x10] sm:$0xff]
        %v519 = vld [vmem:[#allocation2 + $0x18] sm:$0xff]
        %v520 = vld [vmem:[#allocation2 + $0x20] sm:$0xff]
        %v521 = vld [vmem:[#allocation2 + $0x28] sm:$0xff]
        %v522 = vld [vmem:[#allocation2 + $0x30] sm:$0xff]
        %v523 = vld [vmem:[#allocation2 + $0x38] sm:$0xff]
        %v524 = vld [vmem:[%s437] sm:$0xff]
        %v525 = vld [vmem:[%s437 + $0x8] sm:$0xff]
        %v526 = vld [vmem:[%s362] sm:$0xff]
        %v527 = vld [vmem:[%s362 + $0x8] sm:$0xff]
        %v528 = vld [vmem:[%s362 + $0x10] sm:$0xff]
        %v529 = vld [vmem:[%s362 + $0x18] sm:$0xff]
        %v530 = vld [vmem:[%s362 + $0x20] sm:$0xff]
        %v531 = vld [vmem:[%s362 + $0x28] sm:$0xff]
        %v532 = vld [vmem:[%s362 + $0x30] sm:$0xff]
        %v533 = vld [vmem:[%s362 + $0x38] sm:$0xff]
        %v534 = vld [vmem:[%s362 + $0x40] sm:$0xff]
        %v535 = vld [vmem:[%s362 + $0x48] sm:$0xff]
        %v536 = vld [vmem:[%s362 + $0x50] sm:$0xff]
        %v537 = vld [vmem:[%s362 + $0x58] sm:$0xff]
        %v538 = vld [vmem:[%s362 + $0x60] sm:$0xff]
        %v539 = vld [vmem:[%s362 + $0x68] sm:$0xff]
        %v540 = vld [vmem:[%s362 + $0x70] sm:$0xff]
        %v541 = vld [vmem:[%s362 + $0x78] sm:$0xff]
        %v542 = vld [vmem:[%s362 + $0x80] sm:$0xff]
        %v543 = vld [vmem:[%s362 + $0x88] sm:$0xff]
        %v544 = vld [vmem:[%s362 + $0x90] sm:$0xff]
        %v545 = vld [vmem:[%s362 + $0x98] sm:$0xff]
        %v546 = vld [vmem:[%s362 + $0xa0] sm:$0xff]
        %v547 = vld [vmem:[%s362 + $0xa8] sm:$0xff]
        %v548 = vld [vmem:[%s362 + $0xb0] sm:$0xff]
        %v549 = vld [vmem:[%s362 + $0xb8] sm:$0xff]
        %v550 = vld [vmem:[%s362 + $0xc0] sm:$0xff]
        %v551 = vld [vmem:[%s362 + $0xc8] sm:$0xff]
        %v552 = vld [vmem:[%s362 + $0xd0] sm:$0xff]
        %v553 = vld [vmem:[%s362 + $0xd8] sm:$0xff]
        %v554 = vld [vmem:[%s362 + $0xe0] sm:$0xff]
        %v555 = vld [vmem:[%s362 + $0xe8] sm:$0xff]
        %v556 = vld [vmem:[%s362 + $0xf0] sm:$0xff]
        %v557 = vld [vmem:[%s362 + $0xf8] sm:$0xff]
        %v558 = vld [vmem:[%s362 + $0x100] sm:$0xff]
        %v559 = vld [vmem:[%s362 + $0x108] sm:$0xff]
        %v560 = vld [vmem:[%s362 + $0x110] sm:$0xff]
        %v561 = vld [vmem:[%s362 + $0x118] sm:$0xff]
        %v562 = vld [vmem:[%s362 + $0x120] sm:$0xff]
        %v563 = vld [vmem:[%s362 + $0x128] sm:$0xff]
        %v564 = vld [vmem:[%s362 + $0x130] sm:$0xff]
        %v565 = vld [vmem:[%s362 + $0x138] sm:$0xff]
        %v566 = vld [vmem:[%s362 + $0x140] sm:$0xff]
        %v567 = vld [vmem:[%s362 + $0x148] sm:$0xff]
        %v568 = vld [vmem:[%s362 + $0x150] sm:$0xff]
        %v569 = vld [vmem:[%s362 + $0x158] sm:$0xff]
        %v570 = vld [vmem:[%s362 + $0x160] sm:$0xff]
        %v571 = vld [vmem:[%s362 + $0x168] sm:$0xff]
        %v572 = vld [vmem:[%s362 + $0x170] sm:$0xff]
        %v573 = vld [vmem:[%s362 + $0x178] sm:$0xff]
        %v574 = vld [vmem:[%s362 + $0x180] sm:$0xff]
        %v575 = vld [vmem:[%s362 + $0x188] sm:$0xff]
        %v576 = vld [vmem:[%s362 + $0x190] sm:$0xff]
        %v577 = vld [vmem:[%s362 + $0x198] sm:$0xff]
        %v578 = vld [vmem:[%s362 + $0x1a0] sm:$0xff]
        %v579 = vld [vmem:[%s362 + $0x1a8] sm:$0xff]
        %v580 = vld [vmem:[%s362 + $0x1b0] sm:$0xff]
        %v581 = vld [vmem:[%s362 + $0x1b8] sm:$0xff]
        %v582 = vld [vmem:[%s362 + $0x1c0] sm:$0xff]
        %v583 = vld [vmem:[%s362 + $0x1c8] sm:$0xff]
        %v584 = vld [vmem:[%s362 + $0x1d0] sm:$0xff]
        %v585 = vld [vmem:[%s362 + $0x1d8] sm:$0xff]
        %v586 = vld [vmem:[%s362 + $0x1e0] sm:$0xff]
        %v587 = vld [vmem:[%s362 + $0x1e8] sm:$0xff]
        %v588 = vld [vmem:[%s362 + $0x1f0] sm:$0xff]
        %v589 = vld [vmem:[%s362 + $0x1f8] sm:$0xff]
        %v590 = vld [vmem:[%s362 + $0x200] sm:$0xff]
        %v591 = vld [vmem:[%s362 + $0x208] sm:$0xff]
        %v592 = vld [vmem:[%s362 + $0x210] sm:$0xff]
        %v593 = vld [vmem:[%s362 + $0x218] sm:$0xff]
        %v594 = vld [vmem:[%s362 + $0x220] sm:$0xff]
        %v595 = vld [vmem:[%s362 + $0x228] sm:$0xff]
        %v596 = vld [vmem:[%s362 + $0x230] sm:$0xff]
        %v597 = vld [vmem:[%s362 + $0x238] sm:$0xff]
        %v598 = vld [vmem:[%s362 + $0x240] sm:$0xff]
        %v599 = vld [vmem:[%s362 + $0x248] sm:$0xff]
        %v600 = vld [vmem:[%s362 + $0x250] sm:$0xff]
        %v601 = vld [vmem:[%s362 + $0x258] sm:$0xff]
        %v602 = vld [vmem:[%s362 + $0x260] sm:$0xff]
        %v603 = vld [vmem:[%s362 + $0x268] sm:$0xff]
        %v604 = vld [vmem:[%s362 + $0x270] sm:$0xff]
        %v605 = vld [vmem:[%s362 + $0x278] sm:$0xff]
        %v606 = vld [vmem:[%s362 + $0x280] sm:$0xff]
        %v607 = vld [vmem:[%s362 + $0x288] sm:$0xff]
        %v608 = vld [vmem:[%s362 + $0x290] sm:$0xff]
        %v609 = vld [vmem:[%s362 + $0x298] sm:$0xff]
        %v610 = vld [vmem:[%s362 + $0x2a0] sm:$0xff]
        %v611 = vld [vmem:[%s362 + $0x2a8] sm:$0xff]
        %v612 = vld [vmem:[%s362 + $0x2b0] sm:$0xff]
        %v613 = vld [vmem:[%s362 + $0x2b8] sm:$0xff]
        %v614 = vld [vmem:[%s362 + $0x2c0] sm:$0xff]
        %v615 = vld [vmem:[%s362 + $0x2c8] sm:$0xff]
        %v616 = vld [vmem:[%s362 + $0x2d0] sm:$0xff]
        %v617 = vld [vmem:[%s362 + $0x2d8] sm:$0xff]
        %v618 = vld [vmem:[%s362 + $0x2e0] sm:$0xff]
        %v619 = vld [vmem:[%s362 + $0x2e8] sm:$0xff]
        %v620 = vld [vmem:[%s362 + $0x2f0] sm:$0xff]
        %v621 = vld [vmem:[%s362 + $0x2f8] sm:$0xff]
        %v622 = vld [vmem:[%s362 + $0x300] sm:$0xff]
        %v623 = vld [vmem:[%s362 + $0x308] sm:$0xff]
        %v624 = vld [vmem:[%s362 + $0x310] sm:$0xff]
        %v625 = vld [vmem:[%s362 + $0x318] sm:$0xff]
        %v626 = vld [vmem:[%s362 + $0x320] sm:$0xff]
        %v627 = vld [vmem:[%s362 + $0x328] sm:$0xff]
        %v628 = vld [vmem:[%s362 + $0x330] sm:$0xff]
        %v629 = vld [vmem:[%s362 + $0x338] sm:$0xff]
        %v630 = vld [vmem:[%s362 + $0x340] sm:$0xff]
        %v631 = vld [vmem:[%s362 + $0x348] sm:$0xff]
        %v632 = vld [vmem:[%s362 + $0x350] sm:$0xff]
        %v633 = vld [vmem:[%s362 + $0x358] sm:$0xff]
        %v634 = vld [vmem:[%s362 + $0x360] sm:$0xff]
        %v635 = vld [vmem:[%s362 + $0x368] sm:$0xff]
        %v636 = vld [vmem:[%s362 + $0x370] sm:$0xff]
        %v637 = vld [vmem:[%s362 + $0x378] sm:$0xff]
        %v638 = vld [vmem:[%s362 + $0x380] sm:$0xff]
        %v639 = vld [vmem:[%s362 + $0x388] sm:$0xff]
        %v640 = vld [vmem:[%s362 + $0x390] sm:$0xff]
        %v641 = vld [vmem:[%s362 + $0x398] sm:$0xff]
        %v642 = vld [vmem:[%s362 + $0x3a0] sm:$0xff]
        %v643 = vld [vmem:[%s362 + $0x3a8] sm:$0xff]
        %v644 = vld [vmem:[%s362 + $0x3b0] sm:$0xff]
        %v645 = vld [vmem:[%s362 + $0x3b8] sm:$0xff]
        %v646 = vld [vmem:[%s362 + $0x3c0] sm:$0xff]
        %v647 = vld [vmem:[%s362 + $0x3c8] sm:$0xff]
        %v648 = vld [vmem:[%s362 + $0x3d0] sm:$0xff]
        %v649 = vld [vmem:[%s362 + $0x3d8] sm:$0xff]
        %v650 = vld [vmem:[%s362 + $0x3e0] sm:$0xff]
        %v651 = vld [vmem:[%s362 + $0x3e8] sm:$0xff]
        %v652 = vld [vmem:[%s362 + $0x3f0] sm:$0xff]
        %v653 = vld [vmem:[%s362 + $0x3f8] sm:$0xff]
        %v654 = vld [vmem:[%s362 + $0x400] sm:$0xff]
        %v655 = vld [vmem:[%s362 + $0x408] sm:$0xff]
        %v656 = vld [vmem:[%s362 + $0x410] sm:$0xff]
        %v657 = vld [vmem:[%s362 + $0x418] sm:$0xff]
        %v658 = vld [vmem:[%s362 + $0x420] sm:$0xff]
        %v659 = vld [vmem:[%s362 + $0x428] sm:$0xff]
        %v660 = vld [vmem:[%s362 + $0x430] sm:$0xff]
        %v661 = vld [vmem:[%s362 + $0x438] sm:$0xff]
        %v662 = vld [vmem:[%s362 + $0x440] sm:$0xff]
        %v663 = vld [vmem:[%s362 + $0x448] sm:$0xff]
        %v664 = vld [vmem:[%s362 + $0x450] sm:$0xff]
        %v665 = vld [vmem:[%s362 + $0x458] sm:$0xff]
        %v666 = vld [vmem:[%s362 + $0x460] sm:$0xff]
        %v667 = vld [vmem:[%s362 + $0x468] sm:$0xff]
        %v668 = vld [vmem:[%s362 + $0x470] sm:$0xff]
        %v669 = vld [vmem:[%s362 + $0x478] sm:$0xff]
        %v670 = vld [vmem:[%s362 + $0x480] sm:$0xff]
        %v671 = vld [vmem:[%s362 + $0x488] sm:$0xff]
        %v672 = vld [vmem:[%s362 + $0x490] sm:$0xff]
        %v673 = vld [vmem:[%s362 + $0x498] sm:$0xff]
        %v674 = vld [vmem:[%s362 + $0x4a0] sm:$0xff]
        %v675 = vld [vmem:[%s362 + $0x4a8] sm:$0xff]
        %v676 = vld [vmem:[%s362 + $0x4b0] sm:$0xff]
        %v677 = vld [vmem:[%s362 + $0x4b8] sm:$0xff]
        %v678 = vld [vmem:[%s362 + $0x4c0] sm:$0xff]
        %v679 = vld [vmem:[%s362 + $0x4c8] sm:$0xff]
        %v680 = vld [vmem:[%s362 + $0x4d0] sm:$0xff]
        %v681 = vld [vmem:[%s362 + $0x4d8] sm:$0xff]
        %v682 = vld [vmem:[%s362 + $0x4e0] sm:$0xff]
        %v683 = vld [vmem:[%s362 + $0x4e8] sm:$0xff]
        %v684 = vld [vmem:[%s362 + $0x4f0] sm:$0xff]
        %v685 = vld [vmem:[%s362 + $0x4f8] sm:$0xff]
        %v686 = vld [vmem:[%s362 + $0x500] sm:$0xff]
        %v687 = vld [vmem:[%s362 + $0x508] sm:$0xff]
        %v688 = vld [vmem:[%s362 + $0x510] sm:$0xff]
        %v689 = vld [vmem:[%s362 + $0x518] sm:$0xff]
        %v690 = vld [vmem:[%s362 + $0x520] sm:$0xff]
        %v691 = vld [vmem:[%s362 + $0x528] sm:$0xff]
        %v692 = vld [vmem:[%s362 + $0x530] sm:$0xff]
        %v693 = vld [vmem:[%s362 + $0x538] sm:$0xff]
        %v694 = vld [vmem:[%s362 + $0x540] sm:$0xff]
        %v695 = vld [vmem:[%s362 + $0x548] sm:$0xff]
        %v696 = vld [vmem:[%s362 + $0x550] sm:$0xff]
        %v697 = vld [vmem:[%s362 + $0x558] sm:$0xff]
        %v698 = vld [vmem:[%s362 + $0x560] sm:$0xff]
        %v699 = vld [vmem:[%s362 + $0x568] sm:$0xff]
        %v700 = vld [vmem:[%s362 + $0x570] sm:$0xff]
        %v701 = vld [vmem:[%s362 + $0x578] sm:$0xff]
        %v702 = vld [vmem:[%s362 + $0x580] sm:$0xff]
        %v703 = vld [vmem:[%s362 + $0x588] sm:$0xff]
        %v704 = vld [vmem:[%s362 + $0x590] sm:$0xff]
        %v705 = vld [vmem:[%s362 + $0x598] sm:$0xff]
        %v706 = vld [vmem:[%s362 + $0x5a0] sm:$0xff]
        %v707 = vld [vmem:[%s362 + $0x5a8] sm:$0xff]
        %v708 = vld [vmem:[%s362 + $0x5b0] sm:$0xff]
        %v709 = vld [vmem:[%s362 + $0x5b8] sm:$0xff]
        %v710 = vld [vmem:[%s362 + $0x5c0] sm:$0xff]
        %v711 = vld [vmem:[%s362 + $0x5c8] sm:$0xff]
        %v712 = vld [vmem:[%s362 + $0x5d0] sm:$0xff]
        %v713 = vld [vmem:[%s362 + $0x5d8] sm:$0xff]
        %v714 = vld [vmem:[%s362 + $0x5e0] sm:$0xff]
        %v715 = vld [vmem:[%s362 + $0x5e8] sm:$0xff]
        %v716 = vld [vmem:[%s362 + $0x5f0] sm:$0xff]
        %v717 = vld [vmem:[%s362 + $0x5f8] sm:$0xff]
        %v718 = vld [vmem:[%s362 + $0x600] sm:$0xff]
        %v719 = vld [vmem:[%s362 + $0x608] sm:$0xff]
        %v720 = vld [vmem:[%s362 + $0x610] sm:$0xff]
        %v721 = vld [vmem:[%s362 + $0x618] sm:$0xff]
        %v722 = vld [vmem:[%s362 + $0x620] sm:$0xff]
        %v723 = vld [vmem:[%s362 + $0x628] sm:$0xff]
        %v724 = vld [vmem:[%s362 + $0x630] sm:$0xff]
        %v725 = vld [vmem:[%s362 + $0x638] sm:$0xff]
        %v726 = vld [vmem:[%s362 + $0x640] sm:$0xff]
        %v727 = vld [vmem:[%s362 + $0x648] sm:$0xff]
        %v728 = vld [vmem:[%s362 + $0x650] sm:$0xff]
        %v729 = vld [vmem:[%s362 + $0x658] sm:$0xff]
        %v730 = vld [vmem:[%s362 + $0x660] sm:$0xff]
        %v731 = vld [vmem:[%s362 + $0x668] sm:$0xff]
        %v732 = vld [vmem:[%s362 + $0x670] sm:$0xff]
        %v733 = vld [vmem:[%s362 + $0x678] sm:$0xff]
        %v734 = vld [vmem:[%s362 + $0x680] sm:$0xff]
        %v735 = vld [vmem:[%s362 + $0x688] sm:$0xff]
        %v736 = vld [vmem:[%s362 + $0x690] sm:$0xff]
        %v737 = vld [vmem:[%s362 + $0x698] sm:$0xff]
        %v738 = vld [vmem:[%s362 + $0x6a0] sm:$0xff]
        %v739 = vld [vmem:[%s362 + $0x6a8] sm:$0xff]
        %v740 = vld [vmem:[%s362 + $0x6b0] sm:$0xff]
        %v741 = vld [vmem:[%s362 + $0x6b8] sm:$0xff]
        %v742 = vld [vmem:[%s362 + $0x6c0] sm:$0xff]
        %v743 = vld [vmem:[%s362 + $0x6c8] sm:$0xff]
        %v744 = vld [vmem:[%s362 + $0x6d0] sm:$0xff]
        %v745 = vld [vmem:[%s362 + $0x6d8] sm:$0xff]
        %v746 = vld [vmem:[%s362 + $0x6e0] sm:$0xff]
        %v747 = vld [vmem:[%s362 + $0x6e8] sm:$0xff]
        %v748 = vld [vmem:[%s362 + $0x6f0] sm:$0xff]
        %v749 = vld [vmem:[%s362 + $0x6f8] sm:$0xff]
        %v750 = vld [vmem:[%s362 + $0x700] sm:$0xff]
        %v751 = vld [vmem:[%s362 + $0x708] sm:$0xff]
        %v752 = vld [vmem:[%s362 + $0x710] sm:$0xff]
        %v753 = vld [vmem:[%s362 + $0x718] sm:$0xff]
        %v754 = vld [vmem:[%s362 + $0x720] sm:$0xff]
        %v755 = vld [vmem:[%s362 + $0x728] sm:$0xff]
        %v756 = vld [vmem:[%s362 + $0x730] sm:$0xff]
        %v757 = vld [vmem:[%s362 + $0x738] sm:$0xff]
        %v758 = vld [vmem:[%s362 + $0x740] sm:$0xff]
        %v759 = vld [vmem:[%s362 + $0x748] sm:$0xff]
        %v760 = vld [vmem:[%s362 + $0x750] sm:$0xff]
        %v761 = vld [vmem:[%s362 + $0x758] sm:$0xff]
        %v762 = vld [vmem:[%s362 + $0x760] sm:$0xff]
        %v763 = vld [vmem:[%s362 + $0x768] sm:$0xff]
        %v764 = vld [vmem:[%s362 + $0x770] sm:$0xff]
        %v765 = vld [vmem:[%s362 + $0x778] sm:$0xff]
        %v766 = vld [vmem:[%s362 + $0x780] sm:$0xff]
        %v767 = vld [vmem:[%s362 + $0x788] sm:$0xff]
        %v768 = vld [vmem:[%s362 + $0x790] sm:$0xff]
        %v769 = vld [vmem:[%s362 + $0x798] sm:$0xff]
        %v770 = vld [vmem:[%s362 + $0x7a0] sm:$0xff]
        %v771 = vld [vmem:[%s362 + $0x7a8] sm:$0xff]
        %v772 = vld [vmem:[%s362 + $0x7b0] sm:$0xff]
        %v773 = vld [vmem:[%s362 + $0x7b8] sm:$0xff]
        %v774 = vld [vmem:[%s362 + $0x7c0] sm:$0xff]
        %v775 = vld [vmem:[%s362 + $0x7c8] sm:$0xff]
        %v776 = vld [vmem:[%s362 + $0x7d0] sm:$0xff]
        %v777 = vld [vmem:[%s362 + $0x7d8] sm:$0xff]
        %v778 = vld [vmem:[%s362 + $0x7e0] sm:$0xff]
        %v779 = vld [vmem:[%s362 + $0x7e8] sm:$0xff]
        %v780 = vld [vmem:[%s362 + $0x7f0] sm:$0xff]
        %v781 = vld [vmem:[%s362 + $0x7f8] sm:$0xff]
        %782 = vmatprep.subr.mxu0 %v647
        %783 = vmatpush1.msra.mxu0 %v646
        %784 = vmatprep.subr.mxu0 %v639
        %785 = vmatpush1.msra.mxu0 %v638
        %786 = vmatprep.subr.mxu0 %v631
        %787 = vmatpush1.msra.mxu0 %v630
        %788 = vmatprep.subr.mxu0 %v623
        %789 = vmatpush1.msra.mxu0 %v622
        %790 = vmatprep.subr.mxu0 %v615
        %791 = vmatpush1.msra.mxu0 %v614
        %792 = vmatprep.subr.mxu0 %v607
        %793 = vmatpush1.msra.mxu0 %v606
        %794 = vmatprep.subr.mxu0 %v599
        %795 = vmatpush1.msra.mxu0 %v598
        %796 = vmatprep.subr.mxu0 %v591
        %797 = vmatpush1.msra.mxu0 %v590
        %798 = vmatprep.subr.mxu0 %v583
        %799 = vmatpush1.msra.mxu0 %v582
        %800 = vmatprep.subr.mxu0 %v575
        %801 = vmatpush1.msra.mxu0 %v574
        %802 = vmatprep.subr.mxu0 %v567
        %803 = vmatpush1.msra.mxu0 %v566
        %804 = vmatprep.subr.mxu0 %v559
        %805 = vmatpush1.msra.mxu0 %v558
        %806 = vmatprep.subr.mxu0 %v551
        %807 = vmatpush1.msra.mxu0 %v550
        %808 = vmatprep.subr.mxu0 %v543
        %809 = vmatpush1.msra.mxu0 %v542
        %810 = vmatprep.subr.mxu0 %v535
        %811 = vmatpush1.msra.mxu0 %v534
        %812 = vmatprep.subr.mxu0 %v527
        %813 = vmatpush1.msra.mxu0 %v526
        %814 = vmatprep.subr.mxu0 %v775
        %815 = vmatpush2.msra.mxu0 %v774
        %816 = vmatprep.subr.mxu0 %v767
        %817 = vmatpush2.msra.mxu0 %v766
        %818 = vmatprep.subr.mxu0 %v759
        %819 = vmatpush2.msra.mxu0 %v758
        %820 = vmatprep.subr.mxu0 %v751
        %821 = vmatpush2.msra.mxu0 %v750
        %822 = vmatprep.subr.mxu0 %v743
        %823 = vmatpush2.msra.mxu0 %v742
        %824 = vmatprep.subr.mxu0 %v735
        %825 = vmatpush2.msra.mxu0 %v734
        %826 = vmatprep.subr.mxu0 %v727
        %827 = vmatpush2.msra.mxu0 %v726
        %828 = vmatprep.subr.mxu0 %v719
        %829 = vmatpush2.msra.mxu0 %v718
        %830 = vmatprep.subr.mxu0 %v711
        %831 = vmatpush2.msra.mxu0 %v710
        %832 = vmatprep.subr.mxu0 %v703
        %833 = vmatpush2.msra.mxu0 %v702
        %834 = vmatprep.subr.mxu0 %v695
        %835 = vmatpush2.msra.mxu0 %v694
        %836 = vmatprep.subr.mxu0 %v687
        %837 = vmatpush2.msra.mxu0 %v686
        %838 = vmatprep.subr.mxu0 %v679
        %839 = vmatpush2.msra.mxu0 %v678
        %840 = vmatprep.subr.mxu0 %v671
        %841 = vmatpush2.msra.mxu0 %v670
        %842 = vmatprep.subr.mxu0 %v663
        %843 = vmatpush2.msra.mxu0 %v662
        %844 = vmatprep.subr.mxu0 %v655
        %845 = vmatpush2.msra.mxu0 %v654
        %846 = vmatprep.mubr.f32.mxu0 %v525
        %847 = vmatmul.mubr.f32.gmra.mxu0 %v524
        %v848 = vpop.f32.mrf.mxu0
        %v849 = vadd.f32 0.0, %v848
        %v850 = vpop.f32.mrf.mxu0
        %v851 = vadd.f32 0.0, %v850
        %852 = vdwg.mxu0
        %853 = vmatprep.subr.mxu0 %v649
        %854 = vmatpush1.msra.mxu0 %v648
        %855 = vmatprep.subr.mxu0 %v641
        %856 = vmatpush1.msra.mxu0 %v640
        %857 = vmatprep.subr.mxu0 %v633
        %858 = vmatpush1.msra.mxu0 %v632
        %859 = vmatprep.subr.mxu0 %v625
        %860 = vmatpush1.msra.mxu0 %v624
        %861 = vmatprep.subr.mxu0 %v617
        %862 = vmatpush1.msra.mxu0 %v616
        %863 = vmatprep.subr.mxu0 %v609
        %864 = vmatpush1.msra.mxu0 %v608
        %865 = vmatprep.subr.mxu0 %v601
        %866 = vmatpush1.msra.mxu0 %v600
        %867 = vmatprep.subr.mxu0 %v593
        %868 = vmatpush1.msra.mxu0 %v592
        %869 = vmatprep.subr.mxu0 %v585
        %870 = vmatpush1.msra.mxu0 %v584
        %871 = vmatprep.subr.mxu0 %v577
        %872 = vmatpush1.msra.mxu0 %v576
        %873 = vmatprep.subr.mxu0 %v569
        %874 = vmatpush1.msra.mxu0 %v568
        %875 = vmatprep.subr.mxu0 %v561
        %876 = vmatpush1.msra.mxu0 %v560
        %877 = vmatprep.subr.mxu0 %v553
        %878 = vmatpush1.msra.mxu0 %v552
        %879 = vmatprep.subr.mxu0 %v545
        %880 = vmatpush1.msra.mxu0 %v544
        %881 = vmatprep.subr.mxu0 %v537
        %882 = vmatpush1.msra.mxu0 %v536
        %883 = vmatprep.subr.mxu0 %v529
        %884 = vmatpush1.msra.mxu0 %v528
        %885 = vmatprep.subr.mxu0 %v777
        %886 = vmatpush2.msra.mxu0 %v776
        %887 = vmatprep.subr.mxu0 %v769
        %888 = vmatpush2.msra.mxu0 %v768
        %889 = vmatprep.subr.mxu0 %v761
        %890 = vmatpush2.msra.mxu0 %v760
        %891 = vmatprep.subr.mxu0 %v753
        %892 = vmatpush2.msra.mxu0 %v752
        %893 = vmatprep.subr.mxu0 %v745
        %894 = vmatpush2.msra.mxu0 %v744
        %895 = vmatprep.subr.mxu0 %v737
        %896 = vmatpush2.msra.mxu0 %v736
        %897 = vmatprep.subr.mxu0 %v729
        %898 = vmatpush2.msra.mxu0 %v728
        %899 = vmatprep.subr.mxu0 %v721
        %900 = vmatpush2.msra.mxu0 %v720
        %901 = vmatprep.subr.mxu0 %v713
        %902 = vmatpush2.msra.mxu0 %v712
        %903 = vmatprep.subr.mxu0 %v705
        %904 = vmatpush2.msra.mxu0 %v704
        %905 = vmatprep.subr.mxu0 %v697
        %906 = vmatpush2.msra.mxu0 %v696
        %907 = vmatprep.subr.mxu0 %v689
        %908 = vmatpush2.msra.mxu0 %v688
        %909 = vmatprep.subr.mxu0 %v681
        %910 = vmatpush2.msra.mxu0 %v680
        %911 = vmatprep.subr.mxu0 %v673
        %912 = vmatpush2.msra.mxu0 %v672
        %913 = vmatprep.subr.mxu0 %v665
        %914 = vmatpush2.msra.mxu0 %v664
        %915 = vmatprep.subr.mxu0 %v657
        %916 = vmatpush2.msra.mxu0 %v656
        %917 = vmatprep.mubr.f32.mxu0 %v525
        %918 = vmatmul.mubr.f32.gmra.mxu0 %v524
        %v919 = vpop.f32.mrf.mxu0
        %v920 = vadd.f32 0.0, %v919
        %v921 = vpop.f32.mrf.mxu0
        %v922 = vadd.f32 0.0, %v921
        %923 = vdwg.mxu0
        %924 = vmatprep.subr.mxu0 %v651
        %925 = vmatpush1.msra.mxu0 %v650
        %926 = vmatprep.subr.mxu0 %v643
        %927 = vmatpush1.msra.mxu0 %v642
        %928 = vmatprep.subr.mxu0 %v635
        %929 = vmatpush1.msra.mxu0 %v634
        %930 = vmatprep.subr.mxu0 %v627
        %931 = vmatpush1.msra.mxu0 %v626
        %932 = vmatprep.subr.mxu0 %v619
        %933 = vmatpush1.msra.mxu0 %v618
        %934 = vmatprep.subr.mxu0 %v611
        %935 = vmatpush1.msra.mxu0 %v610
        %936 = vmatprep.subr.mxu0 %v603
        %937 = vmatpush1.msra.mxu0 %v602
        %938 = vmatprep.subr.mxu0 %v595
        %939 = vmatpush1.msra.mxu0 %v594
        %940 = vmatprep.subr.mxu0 %v587
        %941 = vmatpush1.msra.mxu0 %v586
        %942 = vmatprep.subr.mxu0 %v579
        %943 = vmatpush1.msra.mxu0 %v578
        %944 = vmatprep.subr.mxu0 %v571
        %945 = vmatpush1.msra.mxu0 %v570
        %946 = vmatprep.subr.mxu0 %v563
        %947 = vmatpush1.msra.mxu0 %v562
        %948 = vmatprep.subr.mxu0 %v555
        %949 = vmatpush1.msra.mxu0 %v554
        %950 = vmatprep.subr.mxu0 %v547
        %951 = vmatpush1.msra.mxu0 %v546
        %952 = vmatprep.subr.mxu0 %v539
        %953 = vmatpush1.msra.mxu0 %v538
        %954 = vmatprep.subr.mxu0 %v531
        %955 = vmatpush1.msra.mxu0 %v530
        %956 = vmatprep.subr.mxu0 %v779
        %957 = vmatpush2.msra.mxu0 %v778
        %958 = vmatprep.subr.mxu0 %v771
        %959 = vmatpush2.msra.mxu0 %v770
        %960 = vmatprep.subr.mxu0 %v763
        %961 = vmatpush2.msra.mxu0 %v762
        %962 = vmatprep.subr.mxu0 %v755
        %963 = vmatpush2.msra.mxu0 %v754
        %964 = vmatprep.subr.mxu0 %v747
        %965 = vmatpush2.msra.mxu0 %v746
        %966 = vmatprep.subr.mxu0 %v739
        %967 = vmatpush2.msra.mxu0 %v738
        %968 = vmatprep.subr.mxu0 %v731
        %969 = vmatpush2.msra.mxu0 %v730
        %970 = vmatprep.subr.mxu0 %v723
        %971 = vmatpush2.msra.mxu0 %v722
        %972 = vmatprep.subr.mxu0 %v715
        %973 = vmatpush2.msra.mxu0 %v714
        %974 = vmatprep.subr.mxu0 %v707
        %975 = vmatpush2.msra.mxu0 %v706
        %976 = vmatprep.subr.mxu0 %v699
        %977 = vmatpush2.msra.mxu0 %v698
        %978 = vmatprep.subr.mxu0 %v691
        %979 = vmatpush2.msra.mxu0 %v690
        %980 = vmatprep.subr.mxu0 %v683
        %981 = vmatpush2.msra.mxu0 %v682
        %982 = vmatprep.subr.mxu0 %v675
        %983 = vmatpush2.msra.mxu0 %v674
        %984 = vmatprep.subr.mxu0 %v667
        %985 = vmatpush2.msra.mxu0 %v666
        %986 = vmatprep.subr.mxu0 %v659
        %987 = vmatpush2.msra.mxu0 %v658
        %988 = vmatprep.mubr.f32.mxu0 %v525
        %989 = vmatmul.mubr.f32.gmra.mxu0 %v524
        %v990 = vpop.f32.mrf.mxu0
        %v991 = vadd.f32 0.0, %v990
        %v992 = vpop.f32.mrf.mxu0
        %v993 = vadd.f32 0.0, %v992
        %994 = vdwg.mxu0
        %995 = vmatprep.subr.mxu0 %v653
        %996 = vmatpush1.msra.mxu0 %v652
        %997 = vmatprep.subr.mxu0 %v645
        %998 = vmatpush1.msra.mxu0 %v644
        %999 = vmatprep.subr.mxu0 %v637
        %1000 = vmatpush1.msra.mxu0 %v636
        %1001 = vmatprep.subr.mxu0 %v629
        %1002 = vmatpush1.msra.mxu0 %v628
        %1003 = vmatprep.subr.mxu0 %v621
        %1004 = vmatpush1.msra.mxu0 %v620
        %1005 = vmatprep.subr.mxu0 %v613
        %1006 = vmatpush1.msra.mxu0 %v612
        %1007 = vmatprep.subr.mxu0 %v605
        %1008 = vmatpush1.msra.mxu0 %v604
        %1009 = vmatprep.subr.mxu0 %v597
        %1010 = vmatpush1.msra.mxu0 %v596
        %1011 = vmatprep.subr.mxu0 %v589
        %1012 = vmatpush1.msra.mxu0 %v588
        %1013 = vmatprep.subr.mxu0 %v581
        %1014 = vmatpush1.msra.mxu0 %v580
        %1015 = vmatprep.subr.mxu0 %v573
        %1016 = vmatpush1.msra.mxu0 %v572
        %1017 = vmatprep.subr.mxu0 %v565
        %1018 = vmatpush1.msra.mxu0 %v564
        %1019 = vmatprep.subr.mxu0 %v557
        %1020 = vmatpush1.msra.mxu0 %v556
        %1021 = vmatprep.subr.mxu0 %v549
        %1022 = vmatpush1.msra.mxu0 %v548
        %1023 = vmatprep.subr.mxu0 %v541
        %1024 = vmatpush1.msra.mxu0 %v540
        %1025 = vmatprep.subr.mxu0 %v533
        %1026 = vmatpush1.msra.mxu0 %v532
        %1027 = vmatprep.subr.mxu0 %v781
        %1028 = vmatpush2.msra.mxu0 %v780
        %1029 = vmatprep.subr.mxu0 %v773
        %1030 = vmatpush2.msra.mxu0 %v772
        %1031 = vmatprep.subr.mxu0 %v765
        %1032 = vmatpush2.msra.mxu0 %v764
        %1033 = vmatprep.subr.mxu0 %v757
        %1034 = vmatpush2.msra.mxu0 %v756
        %1035 = vmatprep.subr.mxu0 %v749
        %1036 = vmatpush2.msra.mxu0 %v748
        %1037 = vmatprep.subr.mxu0 %v741
        %1038 = vmatpush2.msra.mxu0 %v740
        %1039 = vmatprep.subr.mxu0 %v733
        %1040 = vmatpush2.msra.mxu0 %v732
        %1041 = vmatprep.subr.mxu0 %v725
        %1042 = vmatpush2.msra.mxu0 %v724
        %1043 = vmatprep.subr.mxu0 %v717
        %1044 = vmatpush2.msra.mxu0 %v716
        %1045 = vmatprep.subr.mxu0 %v709
        %1046 = vmatpush2.msra.mxu0 %v708
        %1047 = vmatprep.subr.mxu0 %v701
        %1048 = vmatpush2.msra.mxu0 %v700
        %1049 = vmatprep.subr.mxu0 %v693
        %1050 = vmatpush2.msra.mxu0 %v692
        %1051 = vmatprep.subr.mxu0 %v685
        %1052 = vmatpush2.msra.mxu0 %v684
        %1053 = vmatprep.subr.mxu0 %v677
        %1054 = vmatpush2.msra.mxu0 %v676
        %1055 = vmatprep.subr.mxu0 %v669
        %1056 = vmatpush2.msra.mxu0 %v668
        %1057 = vmatprep.subr.mxu0 %v661
        %1058 = vmatpush2.msra.mxu0 %v660
        %1059 = vmatprep.mubr.f32.mxu0 %v525
        %1060 = vmatmul.mubr.f32.gmra.mxu0 %v524
        %v1061 = vpop.f32.mrf.mxu0
        %v1062 = vadd.f32 0.0, %v1061
        %v1063 = vpop.f32.mrf.mxu0
        %v1064 = vadd.f32 0.0, %v1063
        %1065 = vdwg.mxu0
        %v1066 = vadd.f32 %v516, %v849
        %v1067 = vadd.f32 %v517, %v851
        %v1068 = vadd.f32 %v518, %v920
        %v1069 = vadd.f32 %v519, %v922
        %v1070 = vadd.f32 %v520, %v991
        %v1071 = vadd.f32 %v521, %v993
        %v1072 = vadd.f32 %v522, %v1062
        %v1073 = vadd.f32 %v523, %v1064
        %1074 = vst [vmem:[#allocation2] sm:$0xff] %v1066
        %1075 = vst [vmem:[#allocation2 + $0x8] sm:$0xff] %v1067
        %1076 = vst [vmem:[#allocation2 + $0x10] sm:$0xff] %v1068
        %1077 = vst [vmem:[#allocation2 + $0x18] sm:$0xff] %v1069
        %1078 = vst [vmem:[#allocation2 + $0x20] sm:$0xff] %v1070
        %1079 = vst [vmem:[#allocation2 + $0x28] sm:$0xff] %v1071
        %1080 = vst [vmem:[#allocation2 + $0x30] sm:$0xff] %v1072
        %1081 = vst [vmem:[#allocation2 + $0x38] sm:$0xff] %v1073
        // Predicated region
        $region81: #{arch3_forward.1} parent=47 // pred_check
          %p1082 = pneg %p443
        $region82: #{arch3_forward.1} parent=47 // pred_check_branch
          %1084 = sbr.rel (%p1082) target = $region84
        $region83: #{arch3_forward.1} parent=47 // pred_region
          %v1085 = vld [vmem:[#allocation3] sm:$0xff]
          %v1086 = vld [vmem:[#allocation3 + $0x8] sm:$0xff]
          %v1087 = vld [vmem:[#allocation2] sm:$0xff]
          %v1088 = vld [vmem:[#allocation2 + $0x8] sm:$0xff]
          %v1089 = vld [vmem:[#allocation2 + $0x10] sm:$0xff]
          %v1090 = vld [vmem:[#allocation2 + $0x18] sm:$0xff]
          %v1091 = vld [vmem:[#allocation2 + $0x20] sm:$0xff]
          %v1092 = vld [vmem:[#allocation2 + $0x28] sm:$0xff]
          %v1093 = vld [vmem:[#allocation2 + $0x30] sm:$0xff]
          %v1094 = vld [vmem:[#allocation2 + $0x38] sm:$0xff]
          %v1095 = vld [vmem:[%s380] sm:$0xff]
          %v1096 = vld [vmem:[%s380 + $0x8] sm:$0xff]
          %v1097 = vld [vmem:[%s380 + $0x10] sm:$0xff]
          %v1098 = vld [vmem:[%s380 + $0x18] sm:$0xff]
          %v1099 = vld [vmem:[%s380 + $0x20] sm:$0xff]
          %v1100 = vld [vmem:[%s380 + $0x28] sm:$0xff]
          %v1101 = vld [vmem:[%s380 + $0x30] sm:$0xff]
          %v1102 = vld [vmem:[%s380 + $0x38] sm:$0xff]
          %v1103 = vld [vmem:[%s380 + $0x40] sm:$0xff]
          %v1104 = vld [vmem:[%s380 + $0x48] sm:$0xff]
          %v1105 = vld [vmem:[%s380 + $0x50] sm:$0xff]
          %v1106 = vld [vmem:[%s380 + $0x58] sm:$0xff]
          %v1107 = vld [vmem:[%s380 + $0x60] sm:$0xff]
          %v1108 = vld [vmem:[%s380 + $0x68] sm:$0xff]
          %v1109 = vld [vmem:[%s380 + $0x70] sm:$0xff]
          %v1110 = vld [vmem:[%s380 + $0x78] sm:$0xff]
          %v1111 = vld [vmem:[%s380 + $0x80] sm:$0xff]
          %v1112 = vld [vmem:[%s380 + $0x88] sm:$0xff]
          %v1113 = vld [vmem:[%s380 + $0x90] sm:$0xff]
          %v1114 = vld [vmem:[%s380 + $0x98] sm:$0xff]
          %v1115 = vld [vmem:[%s380 + $0xa0] sm:$0xff]
          %v1116 = vld [vmem:[%s380 + $0xa8] sm:$0xff]
          %v1117 = vld [vmem:[%s380 + $0xb0] sm:$0xff]
          %v1118 = vld [vmem:[%s380 + $0xb8] sm:$0xff]
          %v1119 = vld [vmem:[%s380 + $0xc0] sm:$0xff]
          %v1120 = vld [vmem:[%s380 + $0xc8] sm:$0xff]
          %v1121 = vld [vmem:[%s380 + $0xd0] sm:$0xff]
          %v1122 = vld [vmem:[%s380 + $0xd8] sm:$0xff]
          %v1123 = vld [vmem:[%s380 + $0xe0] sm:$0xff]
          %v1124 = vld [vmem:[%s380 + $0xe8] sm:$0xff]
          %v1125 = vld [vmem:[%s380 + $0xf0] sm:$0xff]
          %v1126 = vld [vmem:[%s380 + $0xf8] sm:$0xff]
          %v1127 = vld [vmem:[%s380 + $0x100] sm:$0xff]
          %v1128 = vld [vmem:[%s380 + $0x108] sm:$0xff]
          %v1129 = vld [vmem:[%s380 + $0x110] sm:$0xff]
          %v1130 = vld [vmem:[%s380 + $0x118] sm:$0xff]
          %v1131 = vld [vmem:[%s380 + $0x120] sm:$0xff]
          %v1132 = vld [vmem:[%s380 + $0x128] sm:$0xff]
          %v1133 = vld [vmem:[%s380 + $0x130] sm:$0xff]
          %v1134 = vld [vmem:[%s380 + $0x138] sm:$0xff]
          %v1135 = vld [vmem:[%s380 + $0x140] sm:$0xff]
          %v1136 = vld [vmem:[%s380 + $0x148] sm:$0xff]
          %v1137 = vld [vmem:[%s380 + $0x150] sm:$0xff]
          %v1138 = vld [vmem:[%s380 + $0x158] sm:$0xff]
          %v1139 = vld [vmem:[%s380 + $0x160] sm:$0xff]
          %v1140 = vld [vmem:[%s380 + $0x168] sm:$0xff]
          %v1141 = vld [vmem:[%s380 + $0x170] sm:$0xff]
          %v1142 = vld [vmem:[%s380 + $0x178] sm:$0xff]
          %v1143 = vld [vmem:[%s380 + $0x180] sm:$0xff]
          %v1144 = vld [vmem:[%s380 + $0x188] sm:$0xff]
          %v1145 = vld [vmem:[%s380 + $0x190] sm:$0xff]
          %v1146 = vld [vmem:[%s380 + $0x198] sm:$0xff]
          %v1147 = vld [vmem:[%s380 + $0x1a0] sm:$0xff]
          %v1148 = vld [vmem:[%s380 + $0x1a8] sm:$0xff]
          %v1149 = vld [vmem:[%s380 + $0x1b0] sm:$0xff]
          %v1150 = vld [vmem:[%s380 + $0x1b8] sm:$0xff]
          %v1151 = vld [vmem:[%s380 + $0x1c0] sm:$0xff]
          %v1152 = vld [vmem:[%s380 + $0x1c8] sm:$0xff]
          %v1153 = vld [vmem:[%s380 + $0x1d0] sm:$0xff]
          %v1154 = vld [vmem:[%s380 + $0x1d8] sm:$0xff]
          %v1155 = vld [vmem:[%s380 + $0x1e0] sm:$0xff]
          %v1156 = vld [vmem:[%s380 + $0x1e8] sm:$0xff]
          %v1157 = vld [vmem:[%s380 + $0x1f0] sm:$0xff]
          %v1158 = vld [vmem:[%s380 + $0x1f8] sm:$0xff]
          %v1159 = vld [vmem:[%s380 + $0x200] sm:$0xff]
          %v1160 = vld [vmem:[%s380 + $0x208] sm:$0xff]
          %v1161 = vld [vmem:[%s380 + $0x210] sm:$0xff]
          %v1162 = vld [vmem:[%s380 + $0x218] sm:$0xff]
          %v1163 = vld [vmem:[%s380 + $0x220] sm:$0xff]
          %v1164 = vld [vmem:[%s380 + $0x228] sm:$0xff]
          %v1165 = vld [vmem:[%s380 + $0x230] sm:$0xff]
          %v1166 = vld [vmem:[%s380 + $0x238] sm:$0xff]
          %v1167 = vld [vmem:[%s380 + $0x240] sm:$0xff]
          %v1168 = vld [vmem:[%s380 + $0x248] sm:$0xff]
          %v1169 = vld [vmem:[%s380 + $0x250] sm:$0xff]
          %v1170 = vld [vmem:[%s380 + $0x258] sm:$0xff]
          %v1171 = vld [vmem:[%s380 + $0x260] sm:$0xff]
          %v1172 = vld [vmem:[%s380 + $0x268] sm:$0xff]
          %v1173 = vld [vmem:[%s380 + $0x270] sm:$0xff]
          %v1174 = vld [vmem:[%s380 + $0x278] sm:$0xff]
          %v1175 = vld [vmem:[%s380 + $0x280] sm:$0xff]
          %v1176 = vld [vmem:[%s380 + $0x288] sm:$0xff]
          %v1177 = vld [vmem:[%s380 + $0x290] sm:$0xff]
          %v1178 = vld [vmem:[%s380 + $0x298] sm:$0xff]
          %v1179 = vld [vmem:[%s380 + $0x2a0] sm:$0xff]
          %v1180 = vld [vmem:[%s380 + $0x2a8] sm:$0xff]
          %v1181 = vld [vmem:[%s380 + $0x2b0] sm:$0xff]
          %v1182 = vld [vmem:[%s380 + $0x2b8] sm:$0xff]
          %v1183 = vld [vmem:[%s380 + $0x2c0] sm:$0xff]
          %v1184 = vld [vmem:[%s380 + $0x2c8] sm:$0xff]
          %v1185 = vld [vmem:[%s380 + $0x2d0] sm:$0xff]
          %v1186 = vld [vmem:[%s380 + $0x2d8] sm:$0xff]
          %v1187 = vld [vmem:[%s380 + $0x2e0] sm:$0xff]
          %v1188 = vld [vmem:[%s380 + $0x2e8] sm:$0xff]
          %v1189 = vld [vmem:[%s380 + $0x2f0] sm:$0xff]
          %v1190 = vld [vmem:[%s380 + $0x2f8] sm:$0xff]
          %v1191 = vld [vmem:[%s380 + $0x300] sm:$0xff]
          %v1192 = vld [vmem:[%s380 + $0x308] sm:$0xff]
          %v1193 = vld [vmem:[%s380 + $0x310] sm:$0xff]
          %v1194 = vld [vmem:[%s380 + $0x318] sm:$0xff]
          %v1195 = vld [vmem:[%s380 + $0x320] sm:$0xff]
          %v1196 = vld [vmem:[%s380 + $0x328] sm:$0xff]
          %v1197 = vld [vmem:[%s380 + $0x330] sm:$0xff]
          %v1198 = vld [vmem:[%s380 + $0x338] sm:$0xff]
          %v1199 = vld [vmem:[%s380 + $0x340] sm:$0xff]
          %v1200 = vld [vmem:[%s380 + $0x348] sm:$0xff]
          %v1201 = vld [vmem:[%s380 + $0x350] sm:$0xff]
          %v1202 = vld [vmem:[%s380 + $0x358] sm:$0xff]
          %v1203 = vld [vmem:[%s380 + $0x360] sm:$0xff]
          %v1204 = vld [vmem:[%s380 + $0x368] sm:$0xff]
          %v1205 = vld [vmem:[%s380 + $0x370] sm:$0xff]
          %v1206 = vld [vmem:[%s380 + $0x378] sm:$0xff]
          %v1207 = vld [vmem:[%s380 + $0x380] sm:$0xff]
          %v1208 = vld [vmem:[%s380 + $0x388] sm:$0xff]
          %v1209 = vld [vmem:[%s380 + $0x390] sm:$0xff]
          %v1210 = vld [vmem:[%s380 + $0x398] sm:$0xff]
          %v1211 = vld [vmem:[%s380 + $0x3a0] sm:$0xff]
          %v1212 = vld [vmem:[%s380 + $0x3a8] sm:$0xff]
          %v1213 = vld [vmem:[%s380 + $0x3b0] sm:$0xff]
          %v1214 = vld [vmem:[%s380 + $0x3b8] sm:$0xff]
          %v1215 = vld [vmem:[%s380 + $0x3c0] sm:$0xff]
          %v1216 = vld [vmem:[%s380 + $0x3c8] sm:$0xff]
          %v1217 = vld [vmem:[%s380 + $0x3d0] sm:$0xff]
          %v1218 = vld [vmem:[%s380 + $0x3d8] sm:$0xff]
          %v1219 = vld [vmem:[%s380 + $0x3e0] sm:$0xff]
          %v1220 = vld [vmem:[%s380 + $0x3e8] sm:$0xff]
          %v1221 = vld [vmem:[%s380 + $0x3f0] sm:$0xff]
          %v1222 = vld [vmem:[%s380 + $0x3f8] sm:$0xff]
          %v1223 = vld [vmem:[%s380 + $0x400] sm:$0xff]
          %v1224 = vld [vmem:[%s380 + $0x408] sm:$0xff]
          %v1225 = vld [vmem:[%s380 + $0x410] sm:$0xff]
          %v1226 = vld [vmem:[%s380 + $0x418] sm:$0xff]
          %v1227 = vld [vmem:[%s380 + $0x420] sm:$0xff]
          %v1228 = vld [vmem:[%s380 + $0x428] sm:$0xff]
          %v1229 = vld [vmem:[%s380 + $0x430] sm:$0xff]
          %v1230 = vld [vmem:[%s380 + $0x438] sm:$0xff]
          %v1231 = vld [vmem:[%s380 + $0x440] sm:$0xff]
          %v1232 = vld [vmem:[%s380 + $0x448] sm:$0xff]
          %v1233 = vld [vmem:[%s380 + $0x450] sm:$0xff]
          %v1234 = vld [vmem:[%s380 + $0x458] sm:$0xff]
          %v1235 = vld [vmem:[%s380 + $0x460] sm:$0xff]
          %v1236 = vld [vmem:[%s380 + $0x468] sm:$0xff]
          %v1237 = vld [vmem:[%s380 + $0x470] sm:$0xff]
          %v1238 = vld [vmem:[%s380 + $0x478] sm:$0xff]
          %v1239 = vld [vmem:[%s380 + $0x480] sm:$0xff]
          %v1240 = vld [vmem:[%s380 + $0x488] sm:$0xff]
          %v1241 = vld [vmem:[%s380 + $0x490] sm:$0xff]
          %v1242 = vld [vmem:[%s380 + $0x498] sm:$0xff]
          %v1243 = vld [vmem:[%s380 + $0x4a0] sm:$0xff]
          %v1244 = vld [vmem:[%s380 + $0x4a8] sm:$0xff]
          %v1245 = vld [vmem:[%s380 + $0x4b0] sm:$0xff]
          %v1246 = vld [vmem:[%s380 + $0x4b8] sm:$0xff]
          %v1247 = vld [vmem:[%s380 + $0x4c0] sm:$0xff]
          %v1248 = vld [vmem:[%s380 + $0x4c8] sm:$0xff]
          %v1249 = vld [vmem:[%s380 + $0x4d0] sm:$0xff]
          %v1250 = vld [vmem:[%s380 + $0x4d8] sm:$0xff]
          %v1251 = vld [vmem:[%s380 + $0x4e0] sm:$0xff]
          %v1252 = vld [vmem:[%s380 + $0x4e8] sm:$0xff]
          %v1253 = vld [vmem:[%s380 + $0x4f0] sm:$0xff]
          %v1254 = vld [vmem:[%s380 + $0x4f8] sm:$0xff]
          %v1255 = vld [vmem:[%s380 + $0x500] sm:$0xff]
          %v1256 = vld [vmem:[%s380 + $0x508] sm:$0xff]
          %v1257 = vld [vmem:[%s380 + $0x510] sm:$0xff]
          %v1258 = vld [vmem:[%s380 + $0x518] sm:$0xff]
          %v1259 = vld [vmem:[%s380 + $0x520] sm:$0xff]
          %v1260 = vld [vmem:[%s380 + $0x528] sm:$0xff]
          %v1261 = vld [vmem:[%s380 + $0x530] sm:$0xff]
          %v1262 = vld [vmem:[%s380 + $0x538] sm:$0xff]
          %v1263 = vld [vmem:[%s380 + $0x540] sm:$0xff]
          %v1264 = vld [vmem:[%s380 + $0x548] sm:$0xff]
          %v1265 = vld [vmem:[%s380 + $0x550] sm:$0xff]
          %v1266 = vld [vmem:[%s380 + $0x558] sm:$0xff]
          %v1267 = vld [vmem:[%s380 + $0x560] sm:$0xff]
          %v1268 = vld [vmem:[%s380 + $0x568] sm:$0xff]
          %v1269 = vld [vmem:[%s380 + $0x570] sm:$0xff]
          %v1270 = vld [vmem:[%s380 + $0x578] sm:$0xff]
          %v1271 = vld [vmem:[%s380 + $0x580] sm:$0xff]
          %v1272 = vld [vmem:[%s380 + $0x588] sm:$0xff]
          %v1273 = vld [vmem:[%s380 + $0x590] sm:$0xff]
          %v1274 = vld [vmem:[%s380 + $0x598] sm:$0xff]
          %v1275 = vld [vmem:[%s380 + $0x5a0] sm:$0xff]
          %v1276 = vld [vmem:[%s380 + $0x5a8] sm:$0xff]
          %v1277 = vld [vmem:[%s380 + $0x5b0] sm:$0xff]
          %v1278 = vld [vmem:[%s380 + $0x5b8] sm:$0xff]
          %v1279 = vld [vmem:[%s380 + $0x5c0] sm:$0xff]
          %v1280 = vld [vmem:[%s380 + $0x5c8] sm:$0xff]
          %v1281 = vld [vmem:[%s380 + $0x5d0] sm:$0xff]
          %v1282 = vld [vmem:[%s380 + $0x5d8] sm:$0xff]
          %v1283 = vld [vmem:[%s380 + $0x5e0] sm:$0xff]
          %v1284 = vld [vmem:[%s380 + $0x5e8] sm:$0xff]
          %v1285 = vld [vmem:[%s380 + $0x5f0] sm:$0xff]
          %v1286 = vld [vmem:[%s380 + $0x5f8] sm:$0xff]
          %v1287 = vld [vmem:[%s380 + $0x600] sm:$0xff]
          %v1288 = vld [vmem:[%s380 + $0x608] sm:$0xff]
          %v1289 = vld [vmem:[%s380 + $0x610] sm:$0xff]
          %v1290 = vld [vmem:[%s380 + $0x618] sm:$0xff]
          %v1291 = vld [vmem:[%s380 + $0x620] sm:$0xff]
          %v1292 = vld [vmem:[%s380 + $0x628] sm:$0xff]
          %v1293 = vld [vmem:[%s380 + $0x630] sm:$0xff]
          %v1294 = vld [vmem:[%s380 + $0x638] sm:$0xff]
          %v1295 = vld [vmem:[%s380 + $0x640] sm:$0xff]
          %v1296 = vld [vmem:[%s380 + $0x648] sm:$0xff]
          %v1297 = vld [vmem:[%s380 + $0x650] sm:$0xff]
          %v1298 = vld [vmem:[%s380 + $0x658] sm:$0xff]
          %v1299 = vld [vmem:[%s380 + $0x660] sm:$0xff]
          %v1300 = vld [vmem:[%s380 + $0x668] sm:$0xff]
          %v1301 = vld [vmem:[%s380 + $0x670] sm:$0xff]
          %v1302 = vld [vmem:[%s380 + $0x678] sm:$0xff]
          %v1303 = vld [vmem:[%s380 + $0x680] sm:$0xff]
          %v1304 = vld [vmem:[%s380 + $0x688] sm:$0xff]
          %v1305 = vld [vmem:[%s380 + $0x690] sm:$0xff]
          %v1306 = vld [vmem:[%s380 + $0x698] sm:$0xff]
          %v1307 = vld [vmem:[%s380 + $0x6a0] sm:$0xff]
          %v1308 = vld [vmem:[%s380 + $0x6a8] sm:$0xff]
          %v1309 = vld [vmem:[%s380 + $0x6b0] sm:$0xff]
          %v1310 = vld [vmem:[%s380 + $0x6b8] sm:$0xff]
          %v1311 = vld [vmem:[%s380 + $0x6c0] sm:$0xff]
          %v1312 = vld [vmem:[%s380 + $0x6c8] sm:$0xff]
          %v1313 = vld [vmem:[%s380 + $0x6d0] sm:$0xff]
          %v1314 = vld [vmem:[%s380 + $0x6d8] sm:$0xff]
          %v1315 = vld [vmem:[%s380 + $0x6e0] sm:$0xff]
          %v1316 = vld [vmem:[%s380 + $0x6e8] sm:$0xff]
          %v1317 = vld [vmem:[%s380 + $0x6f0] sm:$0xff]
          %v1318 = vld [vmem:[%s380 + $0x6f8] sm:$0xff]
          %v1319 = vld [vmem:[%s380 + $0x700] sm:$0xff]
          %v1320 = vld [vmem:[%s380 + $0x708] sm:$0xff]
          %v1321 = vld [vmem:[%s380 + $0x710] sm:$0xff]
          %v1322 = vld [vmem:[%s380 + $0x718] sm:$0xff]
          %v1323 = vld [vmem:[%s380 + $0x720] sm:$0xff]
          %v1324 = vld [vmem:[%s380 + $0x728] sm:$0xff]
          %v1325 = vld [vmem:[%s380 + $0x730] sm:$0xff]
          %v1326 = vld [vmem:[%s380 + $0x738] sm:$0xff]
          %v1327 = vld [vmem:[%s380 + $0x740] sm:$0xff]
          %v1328 = vld [vmem:[%s380 + $0x748] sm:$0xff]
          %v1329 = vld [vmem:[%s380 + $0x750] sm:$0xff]
          %v1330 = vld [vmem:[%s380 + $0x758] sm:$0xff]
          %v1331 = vld [vmem:[%s380 + $0x760] sm:$0xff]
          %v1332 = vld [vmem:[%s380 + $0x768] sm:$0xff]
          %v1333 = vld [vmem:[%s380 + $0x770] sm:$0xff]
          %v1334 = vld [vmem:[%s380 + $0x778] sm:$0xff]
          %v1335 = vld [vmem:[%s380 + $0x780] sm:$0xff]
          %v1336 = vld [vmem:[%s380 + $0x788] sm:$0xff]
          %v1337 = vld [vmem:[%s380 + $0x790] sm:$0xff]
          %v1338 = vld [vmem:[%s380 + $0x798] sm:$0xff]
          %v1339 = vld [vmem:[%s380 + $0x7a0] sm:$0xff]
          %v1340 = vld [vmem:[%s380 + $0x7a8] sm:$0xff]
          %v1341 = vld [vmem:[%s380 + $0x7b0] sm:$0xff]
          %v1342 = vld [vmem:[%s380 + $0x7b8] sm:$0xff]
          %v1343 = vld [vmem:[%s380 + $0x7c0] sm:$0xff]
          %v1344 = vld [vmem:[%s380 + $0x7c8] sm:$0xff]
          %v1345 = vld [vmem:[%s380 + $0x7d0] sm:$0xff]
          %v1346 = vld [vmem:[%s380 + $0x7d8] sm:$0xff]
          %v1347 = vld [vmem:[%s380 + $0x7e0] sm:$0xff]
          %v1348 = vld [vmem:[%s380 + $0x7e8] sm:$0xff]
          %v1349 = vld [vmem:[%s380 + $0x7f0] sm:$0xff]
          %v1350 = vld [vmem:[%s380 + $0x7f8] sm:$0xff]
          %1351 = vmatprep.subr.mxu0 %v1126
          %1352 = vmatpush1.msra.mxu0 %v1125
          %1353 = vmatprep.subr.mxu0 %v1124
          %1354 = vmatpush1.msra.mxu0 %v1123
          %1355 = vmatprep.subr.mxu0 %v1122
          %1356 = vmatpush1.msra.mxu0 %v1121
          %1357 = vmatprep.subr.mxu0 %v1120
          %1358 = vmatpush1.msra.mxu0 %v1119
          %1359 = vmatprep.subr.mxu0 %v1118
          %1360 = vmatpush1.msra.mxu0 %v1117
          %1361 = vmatprep.subr.mxu0 %v1116
          %1362 = vmatpush1.msra.mxu0 %v1115
          %1363 = vmatprep.subr.mxu0 %v1114
          %1364 = vmatpush1.msra.mxu0 %v1113
          %1365 = vmatprep.subr.mxu0 %v1112
          %1366 = vmatpush1.msra.mxu0 %v1111
          %1367 = vmatprep.subr.mxu0 %v1110
          %1368 = vmatpush1.msra.mxu0 %v1109
          %1369 = vmatprep.subr.mxu0 %v1108
          %1370 = vmatpush1.msra.mxu0 %v1107
          %1371 = vmatprep.subr.mxu0 %v1106
          %1372 = vmatpush1.msra.mxu0 %v1105
          %1373 = vmatprep.subr.mxu0 %v1104
          %1374 = vmatpush1.msra.mxu0 %v1103
          %1375 = vmatprep.subr.mxu0 %v1102
          %1376 = vmatpush1.msra.mxu0 %v1101
          %1377 = vmatprep.subr.mxu0 %v1100
          %1378 = vmatpush1.msra.mxu0 %v1099
          %1379 = vmatprep.subr.mxu0 %v1098
          %1380 = vmatpush1.msra.mxu0 %v1097
          %1381 = vmatprep.subr.mxu0 %v1096
          %1382 = vmatpush1.msra.mxu0 %v1095
          %1383 = vmatprep.subr.mxu0 %v1158
          %1384 = vmatpush2.msra.mxu0 %v1157
          %1385 = vmatprep.subr.mxu0 %v1156
          %1386 = vmatpush2.msra.mxu0 %v1155
          %1387 = vmatprep.subr.mxu0 %v1154
          %1388 = vmatpush2.msra.mxu0 %v1153
          %1389 = vmatprep.subr.mxu0 %v1152
          %1390 = vmatpush2.msra.mxu0 %v1151
          %1391 = vmatprep.subr.mxu0 %v1150
          %1392 = vmatpush2.msra.mxu0 %v1149
          %1393 = vmatprep.subr.mxu0 %v1148
          %1394 = vmatpush2.msra.mxu0 %v1147
          %1395 = vmatprep.subr.mxu0 %v1146
          %1396 = vmatpush2.msra.mxu0 %v1145
          %1397 = vmatprep.subr.mxu0 %v1144
          %1398 = vmatpush2.msra.mxu0 %v1143
          %1399 = vmatprep.subr.mxu0 %v1142
          %1400 = vmatpush2.msra.mxu0 %v1141
          %1401 = vmatprep.subr.mxu0 %v1140
          %1402 = vmatpush2.msra.mxu0 %v1139
          %1403 = vmatprep.subr.mxu0 %v1138
          %1404 = vmatpush2.msra.mxu0 %v1137
          %1405 = vmatprep.subr.mxu0 %v1136
          %1406 = vmatpush2.msra.mxu0 %v1135
          %1407 = vmatprep.subr.mxu0 %v1134
          %1408 = vmatpush2.msra.mxu0 %v1133
          %1409 = vmatprep.subr.mxu0 %v1132
          %1410 = vmatpush2.msra.mxu0 %v1131
          %1411 = vmatprep.subr.mxu0 %v1130
          %1412 = vmatpush2.msra.mxu0 %v1129
          %1413 = vmatprep.subr.mxu0 %v1128
          %1414 = vmatpush2.msra.mxu0 %v1127
          %1415 = vmatprep.mubr.f32.mxu0 %v1088
          %1416 = vmatmul.mubr.f32.gmra.mxu0 %v1087
          %v1417 = vpop.f32.mrf.mxu0
          %v1418 = vadd.f32 0.0, %v1417
          %v1419 = vpop.f32.mrf.mxu0
          %v1420 = vadd.f32 0.0, %v1419
          %1421 = vdwg.mxu0
          %1422 = vmatprep.subr.mxu0 %v1190
          %1423 = vmatpush1.msra.mxu0 %v1189
          %1424 = vmatprep.subr.mxu0 %v1188
          %1425 = vmatpush1.msra.mxu0 %v1187
          %1426 = vmatprep.subr.mxu0 %v1186
          %1427 = vmatpush1.msra.mxu0 %v1185
          %1428 = vmatprep.subr.mxu0 %v1184
          %1429 = vmatpush1.msra.mxu0 %v1183
          %1430 = vmatprep.subr.mxu0 %v1182
          %1431 = vmatpush1.msra.mxu0 %v1181
          %1432 = vmatprep.subr.mxu0 %v1180
          %1433 = vmatpush1.msra.mxu0 %v1179
          %1434 = vmatprep.subr.mxu0 %v1178
          %1435 = vmatpush1.msra.mxu0 %v1177
          %1436 = vmatprep.subr.mxu0 %v1176
          %1437 = vmatpush1.msra.mxu0 %v1175
          %1438 = vmatprep.subr.mxu0 %v1174
          %1439 = vmatpush1.msra.mxu0 %v1173
          %1440 = vmatprep.subr.mxu0 %v1172
          %1441 = vmatpush1.msra.mxu0 %v1171
          %1442 = vmatprep.subr.mxu0 %v1170
          %1443 = vmatpush1.msra.mxu0 %v1169
          %1444 = vmatprep.subr.mxu0 %v1168
          %1445 = vmatpush1.msra.mxu0 %v1167
          %1446 = vmatprep.subr.mxu0 %v1166
          %1447 = vmatpush1.msra.mxu0 %v1165
          %1448 = vmatprep.subr.mxu0 %v1164
          %1449 = vmatpush1.msra.mxu0 %v1163
          %1450 = vmatprep.subr.mxu0 %v1162
          %1451 = vmatpush1.msra.mxu0 %v1161
          %1452 = vmatprep.subr.mxu0 %v1160
          %1453 = vmatpush1.msra.mxu0 %v1159
          %1454 = vmatprep.subr.mxu0 %v1222
          %1455 = vmatpush2.msra.mxu0 %v1221
          %1456 = vmatprep.subr.mxu0 %v1220
          %1457 = vmatpush2.msra.mxu0 %v1219
          %1458 = vmatprep.subr.mxu0 %v1218
          %1459 = vmatpush2.msra.mxu0 %v1217
          %1460 = vmatprep.subr.mxu0 %v1216
          %1461 = vmatpush2.msra.mxu0 %v1215
          %1462 = vmatprep.subr.mxu0 %v1214
          %1463 = vmatpush2.msra.mxu0 %v1213
          %1464 = vmatprep.subr.mxu0 %v1212
          %1465 = vmatpush2.msra.mxu0 %v1211
          %1466 = vmatprep.subr.mxu0 %v1210
          %1467 = vmatpush2.msra.mxu0 %v1209
          %1468 = vmatprep.subr.mxu0 %v1208
          %1469 = vmatpush2.msra.mxu0 %v1207
          %1470 = vmatprep.subr.mxu0 %v1206
          %1471 = vmatpush2.msra.mxu0 %v1205
          %1472 = vmatprep.subr.mxu0 %v1204
          %1473 = vmatpush2.msra.mxu0 %v1203
          %1474 = vmatprep.subr.mxu0 %v1202
          %1475 = vmatpush2.msra.mxu0 %v1201
          %1476 = vmatprep.subr.mxu0 %v1200
          %1477 = vmatpush2.msra.mxu0 %v1199
          %1478 = vmatprep.subr.mxu0 %v1198
          %1479 = vmatpush2.msra.mxu0 %v1197
          %1480 = vmatprep.subr.mxu0 %v1196
          %1481 = vmatpush2.msra.mxu0 %v1195
          %1482 = vmatprep.subr.mxu0 %v1194
          %1483 = vmatpush2.msra.mxu0 %v1193
          %1484 = vmatprep.subr.mxu0 %v1192
          %1485 = vmatpush2.msra.mxu0 %v1191
          %1486 = vmatprep.mubr.f32.mxu0 %v1090
          %1487 = vmatmul.mubr.f32.gmra.mxu0 %v1089
          %v1488 = vpop.f32.mrf.mxu0
          %v1489 = vadd.f32 %v1418, %v1488
          %v1490 = vpop.f32.mrf.mxu0
          %v1491 = vadd.f32 %v1420, %v1490
          %1492 = vdwg.mxu0
          %1493 = vmatprep.subr.mxu0 %v1254
          %1494 = vmatpush1.msra.mxu0 %v1253
          %1495 = vmatprep.subr.mxu0 %v1252
          %1496 = vmatpush1.msra.mxu0 %v1251
          %1497 = vmatprep.subr.mxu0 %v1250
          %1498 = vmatpush1.msra.mxu0 %v1249
          %1499 = vmatprep.subr.mxu0 %v1248
          %1500 = vmatpush1.msra.mxu0 %v1247
          %1501 = vmatprep.subr.mxu0 %v1246
          %1502 = vmatpush1.msra.mxu0 %v1245
          %1503 = vmatprep.subr.mxu0 %v1244
          %1504 = vmatpush1.msra.mxu0 %v1243
          %1505 = vmatprep.subr.mxu0 %v1242
          %1506 = vmatpush1.msra.mxu0 %v1241
          %1507 = vmatprep.subr.mxu0 %v1240
          %1508 = vmatpush1.msra.mxu0 %v1239
          %1509 = vmatprep.subr.mxu0 %v1238
          %1510 = vmatpush1.msra.mxu0 %v1237
          %1511 = vmatprep.subr.mxu0 %v1236
          %1512 = vmatpush1.msra.mxu0 %v1235
          %1513 = vmatprep.subr.mxu0 %v1234
          %1514 = vmatpush1.msra.mxu0 %v1233
          %1515 = vmatprep.subr.mxu0 %v1232
          %1516 = vmatpush1.msra.mxu0 %v1231
          %1517 = vmatprep.subr.mxu0 %v1230
          %1518 = vmatpush1.msra.mxu0 %v1229
          %1519 = vmatprep.subr.mxu0 %v1228
          %1520 = vmatpush1.msra.mxu0 %v1227
          %1521 = vmatprep.subr.mxu0 %v1226
          %1522 = vmatpush1.msra.mxu0 %v1225
          %1523 = vmatprep.subr.mxu0 %v1224
          %1524 = vmatpush1.msra.mxu0 %v1223
          %1525 = vmatprep.subr.mxu0 %v1286
          %1526 = vmatpush2.msra.mxu0 %v1285
          %1527 = vmatprep.subr.mxu0 %v1284
          %1528 = vmatpush2.msra.mxu0 %v1283
          %1529 = vmatprep.subr.mxu0 %v1282
          %1530 = vmatpush2.msra.mxu0 %v1281
          %1531 = vmatprep.subr.mxu0 %v1280
          %1532 = vmatpush2.msra.mxu0 %v1279
          %1533 = vmatprep.subr.mxu0 %v1278
          %1534 = vmatpush2.msra.mxu0 %v1277
          %1535 = vmatprep.subr.mxu0 %v1276
          %1536 = vmatpush2.msra.mxu0 %v1275
          %1537 = vmatprep.subr.mxu0 %v1274
          %1538 = vmatpush2.msra.mxu0 %v1273
          %1539 = vmatprep.subr.mxu0 %v1272
          %1540 = vmatpush2.msra.mxu0 %v1271
          %1541 = vmatprep.subr.mxu0 %v1270
          %1542 = vmatpush2.msra.mxu0 %v1269
          %1543 = vmatprep.subr.mxu0 %v1268
          %1544 = vmatpush2.msra.mxu0 %v1267
          %1545 = vmatprep.subr.mxu0 %v1266
          %1546 = vmatpush2.msra.mxu0 %v1265
          %1547 = vmatprep.subr.mxu0 %v1264
          %1548 = vmatpush2.msra.mxu0 %v1263
          %1549 = vmatprep.subr.mxu0 %v1262
          %1550 = vmatpush2.msra.mxu0 %v1261
          %1551 = vmatprep.subr.mxu0 %v1260
          %1552 = vmatpush2.msra.mxu0 %v1259
          %1553 = vmatprep.subr.mxu0 %v1258
          %1554 = vmatpush2.msra.mxu0 %v1257
          %1555 = vmatprep.subr.mxu0 %v1256
          %1556 = vmatpush2.msra.mxu0 %v1255
          %1557 = vmatprep.mubr.f32.mxu0 %v1092
          %1558 = vmatmul.mubr.f32.gmra.mxu0 %v1091
          %v1559 = vpop.f32.mrf.mxu0
          %v1560 = vadd.f32 %v1489, %v1559
          %v1561 = vpop.f32.mrf.mxu0
          %v1562 = vadd.f32 %v1491, %v1561
          %1563 = vdwg.mxu0
          %1564 = vmatprep.subr.mxu0 %v1318
          %1565 = vmatpush1.msra.mxu0 %v1317
          %1566 = vmatprep.subr.mxu0 %v1316
          %1567 = vmatpush1.msra.mxu0 %v1315
          %1568 = vmatprep.subr.mxu0 %v1314
          %1569 = vmatpush1.msra.mxu0 %v1313
          %1570 = vmatprep.subr.mxu0 %v1312
          %1571 = vmatpush1.msra.mxu0 %v1311
          %1572 = vmatprep.subr.mxu0 %v1310
          %1573 = vmatpush1.msra.mxu0 %v1309
          %1574 = vmatprep.subr.mxu0 %v1308
          %1575 = vmatpush1.msra.mxu0 %v1307
          %1576 = vmatprep.subr.mxu0 %v1306
          %1577 = vmatpush1.msra.mxu0 %v1305
          %1578 = vmatprep.subr.mxu0 %v1304
          %1579 = vmatpush1.msra.mxu0 %v1303
          %1580 = vmatprep.subr.mxu0 %v1302
          %1581 = vmatpush1.msra.mxu0 %v1301
          %1582 = vmatprep.subr.mxu0 %v1300
          %1583 = vmatpush1.msra.mxu0 %v1299
          %1584 = vmatprep.subr.mxu0 %v1298
          %1585 = vmatpush1.msra.mxu0 %v1297
          %1586 = vmatprep.subr.mxu0 %v1296
          %1587 = vmatpush1.msra.mxu0 %v1295
          %1588 = vmatprep.subr.mxu0 %v1294
          %1589 = vmatpush1.msra.mxu0 %v1293
          %1590 = vmatprep.subr.mxu0 %v1292
          %1591 = vmatpush1.msra.mxu0 %v1291
          %1592 = vmatprep.subr.mxu0 %v1290
          %1593 = vmatpush1.msra.mxu0 %v1289
          %1594 = vmatprep.subr.mxu0 %v1288
          %1595 = vmatpush1.msra.mxu0 %v1287
          %1596 = vmatprep.subr.mxu0 %v1350
          %1597 = vmatpush2.msra.mxu0 %v1349
          %1598 = vmatprep.subr.mxu0 %v1348
          %1599 = vmatpush2.msra.mxu0 %v1347
          %1600 = vmatprep.subr.mxu0 %v1346
          %1601 = vmatpush2.msra.mxu0 %v1345
          %1602 = vmatprep.subr.mxu0 %v1344
          %1603 = vmatpush2.msra.mxu0 %v1343
          %1604 = vmatprep.subr.mxu0 %v1342
          %1605 = vmatpush2.msra.mxu0 %v1341
          %1606 = vmatprep.subr.mxu0 %v1340
          %1607 = vmatpush2.msra.mxu0 %v1339
          %1608 = vmatprep.subr.mxu0 %v1338
          %1609 = vmatpush2.msra.mxu0 %v1337
          %1610 = vmatprep.subr.mxu0 %v1336
          %1611 = vmatpush2.msra.mxu0 %v1335
          %1612 = vmatprep.subr.mxu0 %v1334
          %1613 = vmatpush2.msra.mxu0 %v1333
          %1614 = vmatprep.subr.mxu0 %v1332
          %1615 = vmatpush2.msra.mxu0 %v1331
          %1616 = vmatprep.subr.mxu0 %v1330
          %1617 = vmatpush2.msra.mxu0 %v1329
          %1618 = vmatprep.subr.mxu0 %v1328
          %1619 = vmatpush2.msra.mxu0 %v1327
          %1620 = vmatprep.subr.mxu0 %v1326
          %1621 = vmatpush2.msra.mxu0 %v1325
          %1622 = vmatprep.subr.mxu0 %v1324
          %1623 = vmatpush2.msra.mxu0 %v1323
          %1624 = vmatprep.subr.mxu0 %v1322
          %1625 = vmatpush2.msra.mxu0 %v1321
          %1626 = vmatprep.subr.mxu0 %v1320
          %1627 = vmatpush2.msra.mxu0 %v1319
          %1628 = vmatprep.mubr.f32.mxu0 %v1094
          %1629 = vmatmul.mubr.f32.gmra.mxu0 %v1093
          %v1630 = vpop.f32.mrf.mxu0
          %v1631 = vadd.f32 %v1560, %v1630
          %v1632 = vpop.f32.mrf.mxu0
          %v1633 = vadd.f32 %v1562, %v1632
          %1634 = vdwg.mxu0
          %v1635 = vadd.f32 %v1085, %v1631
          %v1636 = vadd.f32 %v1086, %v1633
          %1637 = vst [vmem:[#allocation3] sm:$0xff] %v1635
          %1638 = vst [vmem:[#allocation3 + $0x8] sm:$0xff] %v1636
        $region84: #{arch3_forward.1} parent=47 // pred_fallthru
          _
        %p1639 = scmp.eq.s32.totalorder %s30, 1
        %p1640 = pnand %p1639, %p443
        %p1641 = pneg %p1640
        // Predicated region
        $region85: #{arch3_forward.1} parent=47 // pred_check
          _
        $region86: #{arch3_forward.1} parent=47 // pred_check_branch
          %1643 = sbr.rel (%p1640) target = $region88
        $region87: #{arch3_forward.1} parent=47 // pred_region
          %v1644 = vld [vmem:[#allocation3] sm:$0xff]
          %v1645 = vld [vmem:[#allocation3 + $0x8] sm:$0xff]
          %v1646 = vld [vmem:[#allocation11] sm:$0xff]
          %v1647 = vld [vmem:[#allocation11 + $0x8] sm:$0xff]
          %v1648 = vld [vmem:[#allocation11 + $0x10] sm:$0xff]
          %v1649 = vld [vmem:[#allocation11 + $0x18] sm:$0xff]
          %v1650 = vld [vmem:[#allocation11 + $0x20] sm:$0xff]
          %v1651 = vld [vmem:[#allocation11 + $0x28] sm:$0xff]
          %v1652 = vld [vmem:[#allocation11 + $0x30] sm:$0xff]
          %v1653 = vld [vmem:[#allocation11 + $0x38] sm:$0xff]
          %v1654 = vld [vmem:[#allocation11 + $0x40] sm:$0xff]
          %v1655 = vld [vmem:[#allocation11 + $0x48] sm:$0xff]
          %v1656 = vld [vmem:[#allocation11 + $0x50] sm:$0xff]
          %v1657 = vld [vmem:[#allocation11 + $0x58] sm:$0xff]
          %v1658 = vld [vmem:[#allocation11 + $0x60] sm:$0xff]
          %v1659 = vld [vmem:[#allocation11 + $0x68] sm:$0xff]
          %v1660 = vld [vmem:[#allocation11 + $0x70] sm:$0xff]
          %v1661 = vld [vmem:[#allocation11 + $0x78] sm:$0xff]
          %v1662 = vld [vmem:[#allocation11 + $0x80] sm:$0xff]
          %v1663 = vld [vmem:[#allocation11 + $0x88] sm:$0xff]
          %v1664 = vld [vmem:[#allocation11 + $0x90] sm:$0xff]
          %v1665 = vld [vmem:[#allocation11 + $0x98] sm:$0xff]
          %v1666 = vld [vmem:[#allocation11 + $0xa0] sm:$0xff]
          %v1667 = vld [vmem:[#allocation11 + $0xa8] sm:$0xff]
          %v1668 = vld [vmem:[#allocation11 + $0xb0] sm:$0xff]
          %v1669 = vld [vmem:[#allocation11 + $0xb8] sm:$0xff]
          %v1670 = vld [vmem:[#allocation11 + $0xc0] sm:$0xff]
          %v1671 = vld [vmem:[#allocation11 + $0xc8] sm:$0xff]
          %v1672 = vld [vmem:[#allocation11 + $0xd0] sm:$0xff]
          %v1673 = vld [vmem:[#allocation11 + $0xd8] sm:$0xff]
          %v1674 = vld [vmem:[#allocation11 + $0xe0] sm:$0xff]
          %v1675 = vld [vmem:[#allocation11 + $0xe8] sm:$0xff]
          %v1676 = vld [vmem:[#allocation11 + $0xf0] sm:$0xff]
          %v1677 = vld [vmem:[#allocation11 + $0xf8] sm:$0xff]
          %v1678 = vld [vmem:[#allocation12] sm:$0x1]
          %v1680 = vlaneseq
          %v1681 = vshrl.u32 %v1680, 7
          %v1682 = vsub.s32 0, %v1681
          %v1683 = vrot.slane %v1678, %v1682
          %1685 = vmatprep.subr.mxu0 0.0
          %1686 = vmatpush1.msra.mxu0 %v1661
          %1687 = vmatprep.subr.mxu0 0.0
          %1688 = vmatpush1.msra.mxu0 %v1660
          %1689 = vmatprep.subr.mxu0 0.0
          %1690 = vmatpush1.msra.mxu0 %v1659
          %1691 = vmatprep.subr.mxu0 0.0
          %1692 = vmatpush1.msra.mxu0 %v1658
          %1693 = vmatprep.subr.mxu0 0.0
          %1694 = vmatpush1.msra.mxu0 %v1657
          %1695 = vmatprep.subr.mxu0 0.0
          %1696 = vmatpush1.msra.mxu0 %v1656
          %1697 = vmatprep.subr.mxu0 0.0
          %1698 = vmatpush1.msra.mxu0 %v1655
          %1699 = vmatprep.subr.mxu0 0.0
          %1700 = vmatpush1.msra.mxu0 %v1654
          %1701 = vmatprep.subr.mxu0 0.0
          %1702 = vmatpush1.msra.mxu0 %v1653
          %1703 = vmatprep.subr.mxu0 0.0
          %1704 = vmatpush1.msra.mxu0 %v1652
          %1705 = vmatprep.subr.mxu0 0.0
          %1706 = vmatpush1.msra.mxu0 %v1651
          %1707 = vmatprep.subr.mxu0 0.0
          %1708 = vmatpush1.msra.mxu0 %v1650
          %1709 = vmatprep.subr.mxu0 0.0
          %1710 = vmatpush1.msra.mxu0 %v1649
          %1711 = vmatprep.subr.mxu0 0.0
          %1712 = vmatpush1.msra.mxu0 %v1648
          %1713 = vmatprep.subr.mxu0 0.0
          %1714 = vmatpush1.msra.mxu0 %v1647
          %1715 = vmatprep.subr.mxu0 0.0
          %1716 = vmatpush1.msra.mxu0 %v1646
          %1717 = vmatprep.subr.mxu0 0.0
          %1718 = vmatpush2.msra.mxu0 %v1677
          %1719 = vmatprep.subr.mxu0 0.0
          %1720 = vmatpush2.msra.mxu0 %v1676
          %1721 = vmatprep.subr.mxu0 0.0
          %1722 = vmatpush2.msra.mxu0 %v1675
          %1723 = vmatprep.subr.mxu0 0.0
          %1724 = vmatpush2.msra.mxu0 %v1674
          %1725 = vmatprep.subr.mxu0 0.0
          %1726 = vmatpush2.msra.mxu0 %v1673
          %1727 = vmatprep.subr.mxu0 0.0
          %1728 = vmatpush2.msra.mxu0 %v1672
          %1729 = vmatprep.subr.mxu0 0.0
          %1730 = vmatpush2.msra.mxu0 %v1671
          %1731 = vmatprep.subr.mxu0 0.0
          %1732 = vmatpush2.msra.mxu0 %v1670
          %1733 = vmatprep.subr.mxu0 0.0
          %1734 = vmatpush2.msra.mxu0 %v1669
          %1735 = vmatprep.subr.mxu0 0.0
          %1736 = vmatpush2.msra.mxu0 %v1668
          %1737 = vmatprep.subr.mxu0 0.0
          %1738 = vmatpush2.msra.mxu0 %v1667
          %1739 = vmatprep.subr.mxu0 0.0
          %1740 = vmatpush2.msra.mxu0 %v1666
          %1741 = vmatprep.subr.mxu0 0.0
          %1742 = vmatpush2.msra.mxu0 %v1665
          %1743 = vmatprep.subr.mxu0 0.0
          %1744 = vmatpush2.msra.mxu0 %v1664
          %1745 = vmatprep.subr.mxu0 0.0
          %1746 = vmatpush2.msra.mxu0 %v1663
          %1747 = vmatprep.subr.mxu0 0.0
          %1748 = vmatpush2.msra.mxu0 %v1662
          %1749 = vmatprep.mubr.f32.mxu0 %v1645
          %1750 = vmatmul.mubr.f32.gmra.mxu0 %v1644
          %v1751 = vpop.f32.mrf.mxu0
          %v1752 = vadd.f32 %v1683, %v1751
          %v1753 = vpop.f32.mrf.mxu0
          %1754 = vdwg.mxu0
          %v1755 = vand.u32 2147483647, %v1752
          %1756 = vst [vmem:[%s7] sm:$0xff] %v1755
        $region88: #{arch3_forward.1} parent=47 // pred_fallthru
          _
        // Predicated region
        $region89: #{arch3_forward.1} parent=47 // pred_check
          %p1757 = pneg %p220
        $region90: #{arch3_forward.1} parent=47 // pred_check_branch
          %1759 = sbr.rel (%p1757) target = $region92
        $region91: #{arch3_forward.1} parent=47 // pred_region
          _
        $region92: #{arch3_forward.1} parent=47 // pred_fallthru
          _
        // Predicated region
        $region93: #{arch3_forward.1} parent=47 // pred_check
          %p1760 = pneg %p220
        $region94: #{arch3_forward.1} parent=47 // pred_check_branch
          %1762 = sbr.rel (%p1760) target = $region96
        $region95: #{arch3_forward.1} parent=47 // pred_region
          _
        $region96: #{arch3_forward.1} parent=47 // pred_fallthru
          _
      $region48: #{arch3_forward.1} parent=5 // pred_fallthru
        _
      %p1763 = scmp.le.s32.totalorder 2, %s21
      // Predicated region
      $region97: #{arch3_forward.1} parent=5 // pred_check
        %p1764 = pneg %p1763
      $region98: #{arch3_forward.1} parent=5 // pred_check_branch
        %1766 = sbr.rel (%p1764) target = $region100
      $region99: #{arch3_forward.1} parent=5 // pred_region
        %s1767 = ssub.s32 %s21, 2
      $region100: #{arch3_forward.1} parent=5 // pred_fallthru
        _
    $region6: #{arch3_forward.1} parent=1 // loop_footer
      %s25 = sadd.s32 1, %s21
    $region7: #{arch3_forward.1} parent=1 // loop_footer_branch
      %20 = sbr.rel target = $region3
    $region8: #{arch3_forward.1} parent=1 // loop_exit
      _
    %1768 = vsyncpa [#allocation5], 1
    %s1769 = scalar_lea.sflag [#allocation5], 1
    %1770 = vsyncpa %s1769, 1
    %1771 = vsyncpa [#allocation7], 1
    %s1772 = scalar_lea.sflag [#allocation7], 1
    %1773 = vsyncpa %s1772, 1
    %1774 = vsyncpa [#allocation10], 1
    %1775 = vsyncpa [#allocation13], 1

</llo_original>
